<compile_context>
chip_gen: v6e
topology: v6e:2x2x1
jax: 0.10.0
libtpu: 0.0.40
codegen_flags: <defaults>
</compile_context>

<pallas_src>
import math

import jax
import jax.numpy as jnp
from jax.experimental import pallas as pl
from jax.experimental.pallas import tpu as pltpu


# ---------------------------------------------------------------------------
# Helpers
# ---------------------------------------------------------------------------
def _round_up(x, m):
    return ((x + m - 1) // m) * m


def _choose_tile_n(N, tile_n=None, max_tile=2048):
    """Pick a lane-aligned point tile. Big tiles amortize per-step overhead;
    cap near N/2 so the grid keeps >=2 steps (v7x megacore sharding)."""
    if tile_n is None:
        half = _round_up(max(N // 2, 1), 128)
        tile_n = max(128, min(max_tile, half))
    else:
        tile_n = _round_up(int(tile_n), 128)
    return tile_n


def _softplus_beta100(x):
    # torch.nn.Softplus(beta=100): (1/beta)*log1p(exp(beta*x)), linear
    # passthrough for beta*x > threshold (=20).  Clamp before exp so the
    # unselected branch never produces inf; multiply by 1/beta (keeps the
    # divide off the EUP).
    beta = 100.0
    inv_beta = 0.01
    bx = beta * x
    soft = jnp.log1p(jnp.exp(jnp.minimum(bx, 20.0))) * inv_beta
    return jnp.where(bx > 20.0, x, soft)


# ---------------------------------------------------------------------------
# Kernel
# ---------------------------------------------------------------------------
def _make_implicit_net_kernel(num_layers, skip_in, matmul_dtype):
    """Kernel signature: (x_ref, w0, w1, ..., w_{L-1}, b_pack, out_ref)

      x_ref  : (d_in_pad, tile_n)          input points (lane-major)
      wl     : (out_l, in_l[_pad])         PyTorch-layout weight
      b_pack : (max_out, L)                column l = bias of layer l (zero-padded)
      out    : (d_out, tile_n)             lane-dense output rows
    """
    inv_sqrt2 = 1.0 / math.sqrt(2.0)

    def kernel(x_ref, *refs):
        out_ref = refs[-1]
        b_ref = refs[-2]
        w_refs = refs[:-2]

        b_all = b_ref[...].astype(jnp.float32)          # (max_out, L)
        inp = x_ref[...].astype(jnp.float32)            # (d_in_pad, tile_n)
        inp_mm = inp.astype(matmul_dtype)

        h = inp
        for l in range(num_layers - 1):
            w = w_refs[l][...]                          # (out_l, in_l)
            out_l = w.shape[0]
            b = b_all[:out_l, l:l + 1]                  # (out_l, 1)

            if l in skip_in:
                # torch: x = cat([x, input], -1) / sqrt(2); x = lin(x)
                # transposed + split over weight columns (no lane/sublane
                # concat inside the kernel):
                k = h.shape[0]
                y = (jnp.dot(w[:, :k], h.astype(matmul_dtype),
                             preferred_element_type=jnp.float32)
                     + jnp.dot(w[:, k:], inp_mm,
                               preferred_element_type=jnp.float32)) * inv_sqrt2
            else:
                y = jnp.dot(w, h.astype(matmul_dtype),
                            preferred_element_type=jnp.float32)

            y = y + b
            if l < num_layers - 2:
                y = _softplus_beta100(y)
            h = y

        out_ref[...] = h.astype(out_ref.dtype)          # (d_out, tile_n), lane-dense

    return kernel


# ---------------------------------------------------------------------------
# Wrapper
# ---------------------------------------------------------------------------
def implicit_net_forward(x, weights, biases, skip_in, *,
                         tile_n=None, max_tile=2048,
                         matmul_dtype=jnp.float32):
    """x: (N, d_in).  weights[l]: (in_l, out_l).  biases[l]: (1, out_l).

    matmul_dtype=jnp.bfloat16 is recommended on v6e/v7x (f32 accumulation is
    kept); leave f32 on v5e (no bf16 VPU/EUP) and for bit-tight references.
    """
    N, d_in = x.shape
    num_layers = len(weights) + 1
    d_out = weights[-1].shape[1]
    skip_in = tuple(skip_in)

    tile_n = _choose_tile_n(N, tile_n, max_tile)
    N_pad = _round_up(N, tile_n)
    d_in_p = _round_up(d_in, 8)

    # Points along lanes; pad N to the tile and d_in to 8 sublanes with zeros.
    x_t = jnp.pad(x.astype(jnp.float32).T,
                  ((0, d_in_p - d_in), (0, N_pad - N)))          # (d_in_p, N_pad)

    # Weights in (out, in) layout; layers that consume the raw input (layer 0
    # and skip layers, whose raw-input columns sit at the end) get their input
    # columns zero-padded to d_in_p so every operand is sublane-aligned.
    w_t = []
    for l, w in enumerate(weights):
        wt = jnp.asarray(w.T, dtype=matmul_dtype)                # (out_l, in_l)
        if l == 0 or l in skip_in:
            wt = jnp.pad(wt, ((0, 0), (0, d_in_p - d_in)))
        w_t.append(wt)

    # Pack all biases into one (max_out, L) operand (column l = layer l).
    L = len(biases)
    max_out = max(int(w.shape[1]) for w in weights)
    b_pack = jnp.zeros((max_out, L), jnp.float32)
    for l, b in enumerate(biases):
        b_pack = b_pack.at[:b.shape[1], l].set(b[0, :].astype(jnp.float32))

    kernel = _make_implicit_net_kernel(num_layers, skip_in, matmul_dtype)

    grid = (N_pad // tile_n,)
    in_specs = [pl.BlockSpec((d_in_p, tile_n), lambda i: (0, i))]
    for wt in w_t:
        # Constant block index -> weight stays resident, no per-step re-DMA.
        in_specs.append(pl.BlockSpec(wt.shape, lambda i: (0, 0)))
    in_specs.append(pl.BlockSpec(b_pack.shape, lambda i: (0, 0)))
    out_specs = pl.BlockSpec((d_out, tile_n), lambda i: (0, i))

    # Advisory cost estimate so XLA schedules this well inside larger graphs.
    flops = 2 * N_pad * sum(int(w.shape[0]) * int(w.shape[1]) for w in weights)
    transcendentals = 2 * N_pad * sum(int(w.shape[1]) for w in weights[:-1])
    bytes_accessed = int(
        4 * (x_t.size + sum(int(wt.size) for wt in w_t) + b_pack.size
             + d_out * N_pad))

    out_t = pl.pallas_call(
        kernel,
        out_shape=jax.ShapeDtypeStruct((d_out, N_pad), x.dtype),
        grid_spec=pltpu.PrefetchScalarGridSpec(
            num_scalar_prefetch=0,
            grid=grid,
            in_specs=in_specs,
            out_specs=out_specs,
        ),
        compiler_params=pltpu.CompilerParams(
            dimension_semantics=("parallel",)),
        cost_estimate=pl.CostEstimate(
            flops=flops,
            transcendentals=transcendentals,
            bytes_accessed=bytes_accessed),
    )(x_t, *w_t, b_pack)

    return out_t[:, :N].T                                        # (N, d_out)


# ---------------------------------------------------------------------------
# Deterministic parameter init (matches ImplicitNet.__init__, geometric_init,
# multires=0, weight_norm=False).  Weights stored (in, out), biases (1, out).
# ---------------------------------------------------------------------------
def init_implicit_net_params(key, d_in, dims, skip_in, d_out=1, bias=1.0):
    full_dims = [d_in] + list(dims) + [d_out]
    num_layers = len(full_dims)
    weights, biases = [], []
    for l in range(num_layers - 1):
        if (l + 1) in skip_in:
            out_dim = full_dims[l + 1] - full_dims[0]
        else:
            out_dim = full_dims[l + 1]
        in_dim = full_dims[l]
        key, wkey = jax.random.split(key)
        if l == num_layers - 2:
            # normal_(mean=sqrt(pi)/sqrt(dims[l]), std=1e-4); bias = -bias
            mean = math.sqrt(math.pi) / math.sqrt(in_dim)
            w = mean + 1e-4 * jax.random.normal(wkey, (in_dim, out_dim),
                                                dtype=jnp.float32)
            b = jnp.full((1, out_dim), -bias, dtype=jnp.float32)
        else:
            # normal_(0, sqrt(2)/sqrt(out_dim)); bias = 0
            std = math.sqrt(2.0) / math.sqrt(out_dim)
            w = std * jax.random.normal(wkey, (in_dim, out_dim),
                                        dtype=jnp.float32)
            b = jnp.zeros((1, out_dim), dtype=jnp.float32)
        weights.append(w)
        biases.append(b)
    return weights, biases, num_layers


# ---------------------------------------------------------------------------
# Pure-JAX reference for verification
# ---------------------------------------------------------------------------
def implicit_net_reference(x, weights, biases, skip_in, num_layers):
    inp = x
    h = x
    for l in range(num_layers - 1):
        if l in skip_in:
            h = jnp.concatenate([h, inp], axis=-1) / math.sqrt(2.0)
        h = h @ weights[l] + biases[l]
        if l < num_layers - 2:
            h = _softplus_beta100(h)
    return h


# ---------------------------------------------------------------------------
# Main
# ---------------------------------------------------------------------------
if __name__ == "__main__":
    # Small config: 3-D points, 4 hidden layers of width 32, skip at layer 2.
    d_in = 3
    dims = [32, 32, 32, 32]
    skip_in = (2,)
    d_out = 1
    N = 1000          # deliberately NOT a multiple of the tile -> exercises padding

    key = jax.random.PRNGKey(0)
    key, pkey, xkey = jax.random.split(key, 3)
    weights, biases, num_layers = init_implicit_net_params(
        pkey, d_in, dims, skip_in, d_out=d_out, bias=1.0)

    x = jax.random.normal(xkey, (N, d_in), dtype=jnp.float32)

    # Auto tile: 512 points/step, N padded to 1024 -> grid of 2 parallel steps.
    out = implicit_net_forward(x, weights, biases, skip_in)
    out = jax.block_until_ready(out)

    ref = implicit_net_reference(x, weights, biases, skip_in, num_layers)
    ref = jax.block_until_ready(ref)

    assert out.shape == (N, d_out), out.shape
    max_err = float(jnp.max(jnp.abs(out - ref)))
    assert jnp.allclose(out, ref, atol=1e-4, rtol=1e-4), f"max abs err {max_err}"

    print("KERNEL_OK")
</pallas_src>

<mosaic_0001>
module attributes {stable_mosaic.version = 11 : i64} {
  func.func @kernel(%arg0: i32, %arg1: memref<8x512xf32, #tpu.memory_space<vmem>>, %arg2: memref<32x8xf32, #tpu.memory_space<vmem>>, %arg3: memref<29x32xf32, #tpu.memory_space<vmem>>, %arg4: memref<32x37xf32, #tpu.memory_space<vmem>>, %arg5: memref<32x32xf32, #tpu.memory_space<vmem>>, %arg6: memref<1x32xf32, #tpu.memory_space<vmem>>, %arg7: memref<32x5xf32, #tpu.memory_space<vmem>>, %arg8: memref<1x512xf32, #tpu.memory_space<vmem>>) attributes {dimension_semantics = [#tpu.dimension_semantics<parallel>], iteration_bounds = array<i64: 2>, scalar_prefetch = 0 : i64, scratch_operands = 0 : i64, tpu.core_type = #tpu.core_type<tc>, window_params = [{transform_indices = @transform_0, window_bounds = array<i64: 8, 512>}, {pipeline_mode = #tpu.pipeline_mode<synchronous>, transform_indices = @transform_1, window_bounds = array<i64: 32, 8>}, {pipeline_mode = #tpu.pipeline_mode<synchronous>, transform_indices = @transform_2, window_bounds = array<i64: 29, 32>}, {pipeline_mode = #tpu.pipeline_mode<synchronous>, transform_indices = @transform_3, window_bounds = array<i64: 32, 37>}, {pipeline_mode = #tpu.pipeline_mode<synchronous>, transform_indices = @transform_4, window_bounds = array<i64: 32, 32>}, {pipeline_mode = #tpu.pipeline_mode<synchronous>, transform_indices = @transform_5, window_bounds = array<i64: 1, 32>}, {pipeline_mode = #tpu.pipeline_mode<synchronous>, transform_indices = @transform_6, window_bounds = array<i64: 32, 5>}, {transform_indices = @transform_7, window_bounds = array<i64: 1, 512>}]} {
    %c0 = arith.constant 0 : index
    %c0_0 = arith.constant 0 : index
    %0 = vector.load %arg7[%c0, %c0_0] : memref<32x5xf32, #tpu.memory_space<vmem>>, vector<32x5xf32>
    %c0_1 = arith.constant 0 : index
    %c0_2 = arith.constant 0 : index
    %1 = vector.load %arg1[%c0_1, %c0_2] : memref<8x512xf32, #tpu.memory_space<vmem>>, vector<8x512xf32>
    %c0_3 = arith.constant 0 : index
    %c0_4 = arith.constant 0 : index
    %2 = vector.load %arg2[%c0_3, %c0_4] : memref<32x8xf32, #tpu.memory_space<vmem>>, vector<32x8xf32>
    %3 = vector.extract_strided_slice %0 {offsets = [0, 0], sizes = [32, 1], strides = [1, 1]} : vector<32x5xf32> to vector<32x1xf32>
    %cst = arith.constant dense<0.000000e+00> : vector<32x512xf32>
    %4 = tpu.matmul %2, %1, %cst {dimension_numbers = #tpu.dot_dimension_numbers<[1], [0], [0], [1], [0, 0, 1, 1], [], []>} : vector<32x8xf32>, vector<8x512xf32>, vector<32x512xf32> -> vector<32x512xf32>
    %5 = vector.broadcast %3 : vector<32x1xf32> to vector<32x512xf32>
    %6 = arith.addf %4, %5 : vector<32x512xf32>
    %cst_5 = arith.constant 1.000000e+02 : f32
    %7 = vector.broadcast %cst_5 : f32 to vector<32x512xf32>
    %8 = arith.mulf %7, %6 : vector<32x512xf32>
    %cst_6 = arith.constant 2.000000e+01 : f32
    %9 = vector.broadcast %cst_6 : f32 to vector<32x512xf32>
    %10 = arith.minimumf %8, %9 : vector<32x512xf32>
    %11 = math.exp %10 : vector<32x512xf32>
    %12 = math.log1p %11 : vector<32x512xf32>
    %cst_7 = arith.constant 0.00999999977 : f32
    %13 = vector.broadcast %cst_7 : f32 to vector<32x512xf32>
    %14 = arith.mulf %12, %13 : vector<32x512xf32>
    %cst_8 = arith.constant 2.000000e+01 : f32
    %15 = vector.broadcast %cst_8 : f32 to vector<32x512xf32>
    %16 = arith.cmpf ogt, %8, %15 : vector<32x512xf32>
    %17 = arith.select %16, %6, %14 : vector<32x512xi1>, vector<32x512xf32>
    %c0_9 = arith.constant 0 : index
    %c0_10 = arith.constant 0 : index
    %18 = vector.load %arg3[%c0_9, %c0_10] : memref<29x32xf32, #tpu.memory_space<vmem>>, vector<29x32xf32>
    %19 = vector.extract_strided_slice %0 {offsets = [0, 1], sizes = [29, 1], strides = [1, 1]} : vector<32x5xf32> to vector<29x1xf32>
    %cst_11 = arith.constant dense<0.000000e+00> : vector<29x512xf32>
    %20 = tpu.matmul %18, %17, %cst_11 {dimension_numbers = #tpu.dot_dimension_numbers<[1], [0], [0], [1], [0, 0, 1, 1], [], []>} : vector<29x32xf32>, vector<32x512xf32>, vector<29x512xf32> -> vector<29x512xf32>
    %21 = vector.broadcast %19 : vector<29x1xf32> to vector<29x512xf32>
    %22 = arith.addf %20, %21 : vector<29x512xf32>
    %cst_12 = arith.constant 1.000000e+02 : f32
    %23 = vector.broadcast %cst_12 : f32 to vector<29x512xf32>
    %24 = arith.mulf %23, %22 : vector<29x512xf32>
    %cst_13 = arith.constant 2.000000e+01 : f32
    %25 = vector.broadcast %cst_13 : f32 to vector<29x512xf32>
    %26 = arith.minimumf %24, %25 : vector<29x512xf32>
    %27 = math.exp %26 : vector<29x512xf32>
    %28 = math.log1p %27 : vector<29x512xf32>
    %cst_14 = arith.constant 0.00999999977 : f32
    %29 = vector.broadcast %cst_14 : f32 to vector<29x512xf32>
    %30 = arith.mulf %28, %29 : vector<29x512xf32>
    %cst_15 = arith.constant 2.000000e+01 : f32
    %31 = vector.broadcast %cst_15 : f32 to vector<29x512xf32>
    %32 = arith.cmpf ogt, %24, %31 : vector<29x512xf32>
    %33 = arith.select %32, %22, %30 : vector<29x512xi1>, vector<29x512xf32>
    %c0_16 = arith.constant 0 : index
    %c0_17 = arith.constant 0 : index
    %34 = vector.load %arg4[%c0_16, %c0_17] : memref<32x37xf32, #tpu.memory_space<vmem>>, vector<32x37xf32>
    %35 = vector.extract_strided_slice %0 {offsets = [0, 2], sizes = [32, 1], strides = [1, 1]} : vector<32x5xf32> to vector<32x1xf32>
    %36 = vector.extract_strided_slice %34 {offsets = [0, 0], sizes = [32, 29], strides = [1, 1]} : vector<32x37xf32> to vector<32x29xf32>
    %cst_18 = arith.constant dense<0.000000e+00> : vector<32x512xf32>
    %37 = tpu.matmul %36, %33, %cst_18 {dimension_numbers = #tpu.dot_dimension_numbers<[1], [0], [0], [1], [0, 0, 1, 1], [], []>} : vector<32x29xf32>, vector<29x512xf32>, vector<32x512xf32> -> vector<32x512xf32>
    %38 = vector.extract_strided_slice %34 {offsets = [0, 29], sizes = [32, 8], strides = [1, 1]} : vector<32x37xf32> to vector<32x8xf32>
    %cst_19 = arith.constant dense<0.000000e+00> : vector<32x512xf32>
    %39 = tpu.matmul %38, %1, %cst_19 {dimension_numbers = #tpu.dot_dimension_numbers<[1], [0], [0], [1], [0, 0, 1, 1], [], []>} : vector<32x8xf32>, vector<8x512xf32>, vector<32x512xf32> -> vector<32x512xf32>
    %40 = arith.addf %37, %39 : vector<32x512xf32>
    %cst_20 = arith.constant 0.707106769 : f32
    %41 = vector.broadcast %cst_20 : f32 to vector<32x512xf32>
    %42 = arith.mulf %40, %41 : vector<32x512xf32>
    %43 = vector.broadcast %35 : vector<32x1xf32> to vector<32x512xf32>
    %44 = arith.addf %42, %43 : vector<32x512xf32>
    %cst_21 = arith.constant 1.000000e+02 : f32
    %45 = vector.broadcast %cst_21 : f32 to vector<32x512xf32>
    %46 = arith.mulf %45, %44 : vector<32x512xf32>
    %cst_22 = arith.constant 2.000000e+01 : f32
    %47 = vector.broadcast %cst_22 : f32 to vector<32x512xf32>
    %48 = arith.minimumf %46, %47 : vector<32x512xf32>
    %49 = math.exp %48 : vector<32x512xf32>
    %50 = math.log1p %49 : vector<32x512xf32>
    %cst_23 = arith.constant 0.00999999977 : f32
    %51 = vector.broadcast %cst_23 : f32 to vector<32x512xf32>
    %52 = arith.mulf %50, %51 : vector<32x512xf32>
    %cst_24 = arith.constant 2.000000e+01 : f32
    %53 = vector.broadcast %cst_24 : f32 to vector<32x512xf32>
    %54 = arith.cmpf ogt, %46, %53 : vector<32x512xf32>
    %55 = arith.select %54, %44, %52 : vector<32x512xi1>, vector<32x512xf32>
    %c0_25 = arith.constant 0 : index
    %c0_26 = arith.constant 0 : index
    %56 = vector.load %arg5[%c0_25, %c0_26] : memref<32x32xf32, #tpu.memory_space<vmem>>, vector<32x32xf32>
    %57 = vector.extract_strided_slice %0 {offsets = [0, 3], sizes = [32, 1], strides = [1, 1]} : vector<32x5xf32> to vector<32x1xf32>
    %cst_27 = arith.constant dense<0.000000e+00> : vector<32x512xf32>
    %58 = tpu.matmul %56, %55, %cst_27 {dimension_numbers = #tpu.dot_dimension_numbers<[1], [0], [0], [1], [0, 0, 1, 1], [], []>} : vector<32x32xf32>, vector<32x512xf32>, vector<32x512xf32> -> vector<32x512xf32>
    %59 = vector.broadcast %57 : vector<32x1xf32> to vector<32x512xf32>
    %60 = arith.addf %58, %59 : vector<32x512xf32>
    %cst_28 = arith.constant 1.000000e+02 : f32
    %61 = vector.broadcast %cst_28 : f32 to vector<32x512xf32>
    %62 = arith.mulf %61, %60 : vector<32x512xf32>
    %cst_29 = arith.constant 2.000000e+01 : f32
    %63 = vector.broadcast %cst_29 : f32 to vector<32x512xf32>
    %64 = arith.minimumf %62, %63 : vector<32x512xf32>
    %65 = math.exp %64 : vector<32x512xf32>
    %66 = math.log1p %65 : vector<32x512xf32>
    %cst_30 = arith.constant 0.00999999977 : f32
    %67 = vector.broadcast %cst_30 : f32 to vector<32x512xf32>
    %68 = arith.mulf %66, %67 : vector<32x512xf32>
    %cst_31 = arith.constant 2.000000e+01 : f32
    %69 = vector.broadcast %cst_31 : f32 to vector<32x512xf32>
    %70 = arith.cmpf ogt, %62, %69 : vector<32x512xf32>
    %71 = arith.select %70, %60, %68 : vector<32x512xi1>, vector<32x512xf32>
    %c0_32 = arith.constant 0 : index
    %c0_33 = arith.constant 0 : index
    %72 = vector.load %arg6[%c0_32, %c0_33] : memref<1x32xf32, #tpu.memory_space<vmem>>, vector<1x32xf32>
    %73 = vector.extract_strided_slice %0 {offsets = [0, 4], sizes = [1, 1], strides = [1, 1]} : vector<32x5xf32> to vector<1x1xf32>
    %cst_34 = arith.constant dense<0.000000e+00> : vector<1x512xf32>
    %74 = tpu.matmul %72, %71, %cst_34 {dimension_numbers = #tpu.dot_dimension_numbers<[1], [0], [0], [1], [0, 0, 1, 1], [], []>} : vector<1x32xf32>, vector<32x512xf32>, vector<1x512xf32> -> vector<1x512xf32>
    %75 = vector.broadcast %73 : vector<1x1xf32> to vector<1x512xf32>
    %76 = arith.addf %74, %75 : vector<1x512xf32>
    %c0_35 = arith.constant 0 : index
    %c0_36 = arith.constant 0 : index
    %77 = vector.load %arg8[%c0_35, %c0_36] : memref<1x512xf32, #tpu.memory_space<vmem>>, vector<1x512xf32>
    tpu.vector_store %arg8[%c0_35, %c0_36], %76 {strides = array<i32>} : memref<1x512xf32, #tpu.memory_space<vmem>>, vector<1x512xf32>,
    return
  }
  func.func @transform_0(%arg0: i32) -> (i32, i32) {
    %c0_i32 = arith.constant 0 : i32
    %c0_i32_0 = arith.constant 0 : i32
    return %c0_i32, %arg0 : i32, i32
  }
  func.func @transform_1(%arg0: i32) -> (i32, i32) {
    %c0_i32 = arith.constant 0 : i32
    %c0_i32_0 = arith.constant 0 : i32
    %c0_i32_1 = arith.constant 0 : i32
    return %c0_i32, %c0_i32_0 : i32, i32
  }
  func.func @transform_2(%arg0: i32) -> (i32, i32) {
    %c0_i32 = arith.constant 0 : i32
    %c0_i32_0 = arith.constant 0 : i32
    %c0_i32_1 = arith.constant 0 : i32
    return %c0_i32, %c0_i32_0 : i32, i32
  }
  func.func @transform_3(%arg0: i32) -> (i32, i32) {
    %c0_i32 = arith.constant 0 : i32
    %c0_i32_0 = arith.constant 0 : i32
    %c0_i32_1 = arith.constant 0 : i32
    return %c0_i32, %c0_i32_0 : i32, i32
  }
  func.func @transform_4(%arg0: i32) -> (i32, i32) {
    %c0_i32 = arith.constant 0 : i32
    %c0_i32_0 = arith.constant 0 : i32
    %c0_i32_1 = arith.constant 0 : i32
    return %c0_i32, %c0_i32_0 : i32, i32
  }
  func.func @transform_5(%arg0: i32) -> (i32, i32) {
    %c0_i32 = arith.constant 0 : i32
    %c0_i32_0 = arith.constant 0 : i32
    %c0_i32_1 = arith.constant 0 : i32
    return %c0_i32, %c0_i32_0 : i32, i32
  }
  func.func @transform_6(%arg0: i32) -> (i32, i32) {
    %c0_i32 = arith.constant 0 : i32
    %c0_i32_0 = arith.constant 0 : i32
    %c0_i32_1 = arith.constant 0 : i32
    return %c0_i32, %c0_i32_0 : i32, i32
  }
  func.func @transform_7(%arg0: i32) -> (i32, i32) {
    %c0_i32 = arith.constant 0 : i32
    %c0_i32_0 = arith.constant 0 : i32
    return %c0_i32, %arg0 : i32, i32
  }
}

</mosaic_0001>

<llo_original>
// kernel: tpu_custom_call.1
$region0: #{tpu_custom_call.1}
  #allocation0 [shape = 'u32[]', space=smem, size = 0x4, offset = 0x4, fixed_abs, tag = 'smem constant byte address 0x4 - core index']
  #allocation1 [shape = 'u32[144,128]{1,0:T(1,128)}', space=vmem, size = 0x12000, scoped, tag = 'internal scratch']
  %s0 = inlined_call_operand.vmem [shape: f32[8,1024], index: 0, kind: input, shape index: {}]
  %s1 = inlined_call_operand.vmem [shape: f32[32,8], index: 1, kind: input, shape index: {}]
  %s2 = inlined_call_operand.hbm [shape: f32[29,32], index: 2, kind: input, shape index: {}]
  %s3 = inlined_call_operand.hbm [shape: f32[32,37], index: 3, kind: input, shape index: {}]
  %s4 = inlined_call_operand.hbm [shape: f32[32,32], index: 4, kind: input, shape index: {}]
  %s5 = inlined_call_operand.vmem [shape: f32[1,32], index: 5, kind: input, shape index: {}]
  %s6 = inlined_call_operand.vmem [shape: f32[32,5], index: 6, kind: input, shape index: {}]
  %s7 = inlined_call_operand.hbm [shape: f32[1,1024], index: 7, kind: output, shape index: {}]
  %s8 = sld [smem:[#allocation0]]
  $region73: #{tpu_custom_call.1} parent=0
    _
  %s10 = ssub.s32 1, %s8
  %s11 = scalar_select 0, %s10, %s8
  $region1: #{tpu_custom_call.1} parent=0
    #allocation2 [shape = 'u8[16384]{0}', space=vmem, size = 0x4000, scoped, tag = 'input window, operand 2, single buffered']
    #allocation3 [shape = 's32[2]{0}', space=sflag, size = 0x8, scoped, tag = 'scoped memory for tpu_custom_call.1']
    #allocation4 [shape = 's32[2]{0}', space=sflag, size = 0x8, scoped, tag = 'scoped memory for tpu_custom_call.1']
    #allocation5 [shape = 'u8[16384]{0}', space=vmem, size = 0x4000, scoped, tag = 'input window, operand 3, single buffered']
    #allocation6 [shape = 's32[1]{0}', space=sflag, size = 0x4, scoped, tag = 'scoped memory for tpu_custom_call.1']
    #allocation7 [shape = 'u8[16384]{0}', space=vmem, size = 0x4000, scoped, tag = 'input window, operand 4, single buffered']
    #allocation8 [shape = 'u8[4096]{0}', space=vmem, size = 0x1000, scoped, tag = 'output window, operand 0']
    %12 = vsyncpa [#allocation3], 0
    %13 = vsyncpa [#allocation6], 0
    %14 = vsyncpa [#allocation4], 0
    %s15 = scalar_lea.sflag [#allocation4], 1
    %16 = vsyncpa %s15, 0
    loop: start=0, step=1, limit=4
    $region2: #{tpu_custom_call.1} parent=1 // loop_pre_header
      _
    $region3: #{tpu_custom_call.1} parent=1 // loop_header
      %s18 = sphi 0, %s22
      %p19 = scmp.ge.s32.totalorder %s18, 4
      %s28 = sphi 0, %s30
      %s31 = sphi 0, %s28
      %s32 = sphi 0, %s31
      %s48 = sphi 0, %s32
      %s52 = sphi 0, %s52
      %s54 = sphi 0, %s52
      %s55 = sphi 0, %s54
      %s69 = sphi 0, %s55
      %s73 = sphi 0, %s73
      %s75 = sphi 0, %s73
      %s76 = sphi 0, %s75
      %s90 = sphi 0, %s76
      %s94 = sphi 0, %s94
      %s96 = sphi 0, %s94
      %s97 = sphi 0, %s96
      %s111 = sphi 0, %s97
      %s115 = sphi 0, %s115
      %s117 = sphi 0, %s115
      %s118 = sphi 0, %s117
      %s132 = sphi 0, %s118
      %s136 = sphi 0, %s136
      %s138 = sphi 0, %s136
      %s139 = sphi 0, %s138
      %s153 = sphi 0, %s139
      %s157 = sphi 0, %s157
      %s159 = sphi 0, %s157
      %s160 = sphi 0, %s159
      %s174 = sphi 0, %s160
      %s180 = sphi 0, %s182
      %s183 = sphi 0, %s180
      %s184 = sphi 0, %s183
      %s200 = sphi 0, %s184
    $region4: #{tpu_custom_call.1} parent=1 // loop_header_branch
      %21 = sbr.rel (%p19) target = $region8
    $region5: #{tpu_custom_call.1} parent=1 // loop_body
      %s23 = ssub.s32 %s18, 1
      %s24 = ssub.s32 %s18, 2
      %s25 = sadd.s32 %s18, 1
      %s26 = ssub.s32 %s18, %s25
      %p27 = scmp.eq.s32.totalorder %s26, 0
      %s29 = sadd.s32 %s28, 1
      %s30 = scalar_select %p27, %s28, %s29
      %p33 = pneg %p27
      %p34 = scmp.eq.s32.totalorder %s18, 1
      %p35 = por %p33, %p34
      %p36 = scmp.ne.s32.totalorder %s28, %s31
      %p37 = scmp.eq.s32.totalorder %s18, 0
      %p38 = por %p36, %p37
      %p39 = scmp.ne.s32.totalorder %s28, %s31
      %p40 = scmp.eq.s32.totalorder %s23, 1
      %p41 = por %p39, %p40
      %p42 = scmp.ne.s32.totalorder %s31, %s32
      %p43 = scmp.eq.s32.totalorder %s23, 0
      %p44 = por %p42, %p43
      %p45 = scmp.ne.s32.totalorder %s31, %s32
      %p46 = scmp.eq.s32.totalorder %s24, 1
      %p47 = por %p45, %p46
      %p49 = scmp.ne.s32.totalorder %s32, %s48
      %p50 = scmp.eq.s32.totalorder %s24, 0
      %p51 = por %p49, %p50
      %s53 = sadd.s32 %s52, 1
      %p56 = scmp.eq.s32.totalorder %s18, 1
      %p57 = scmp.ne.s32.totalorder %s52, %s54
      %p58 = scmp.eq.s32.totalorder %s18, 0
      %p59 = por %p57, %p58
      %p60 = scmp.ne.s32.totalorder %s52, %s54
      %p61 = scmp.eq.s32.totalorder %s23, 1
      %p62 = por %p60, %p61
      %p63 = scmp.ne.s32.totalorder %s54, %s55
      %p64 = scmp.eq.s32.totalorder %s23, 0
      %p65 = por %p63, %p64
      %p66 = scmp.ne.s32.totalorder %s54, %s55
      %p67 = scmp.eq.s32.totalorder %s24, 1
      %p68 = por %p66, %p67
      %p70 = scmp.ne.s32.totalorder %s55, %s69
      %p71 = scmp.eq.s32.totalorder %s24, 0
      %p72 = por %p70, %p71
      %s74 = sadd.s32 %s73, 1
      %p77 = scmp.eq.s32.totalorder %s18, 1
      %p78 = scmp.ne.s32.totalorder %s73, %s75
      %p79 = scmp.eq.s32.totalorder %s18, 0
      %p80 = por %p78, %p79
      %p81 = scmp.ne.s32.totalorder %s73, %s75
      %p82 = scmp.eq.s32.totalorder %s23, 1
      %p83 = por %p81, %p82
      %p84 = scmp.ne.s32.totalorder %s75, %s76
      %p85 = scmp.eq.s32.totalorder %s23, 0
      %p86 = por %p84, %p85
      %p87 = scmp.ne.s32.totalorder %s75, %s76
      %p88 = scmp.eq.s32.totalorder %s24, 1
      %p89 = por %p87, %p88
      %p91 = scmp.ne.s32.totalorder %s76, %s90
      %p92 = scmp.eq.s32.totalorder %s24, 0
      %p93 = por %p91, %p92
      %s95 = sadd.s32 %s94, 1
      %p98 = scmp.eq.s32.totalorder %s18, 1
      %p99 = scmp.ne.s32.totalorder %s94, %s96
      %p100 = scmp.eq.s32.totalorder %s18, 0
      %p101 = por %p99, %p100
      %p102 = scmp.ne.s32.totalorder %s94, %s96
      %p103 = scmp.eq.s32.totalorder %s23, 1
      %p104 = por %p102, %p103
      %p105 = scmp.ne.s32.totalorder %s96, %s97
      %p106 = scmp.eq.s32.totalorder %s23, 0
      %p107 = por %p105, %p106
      %p108 = scmp.ne.s32.totalorder %s96, %s97
      %p109 = scmp.eq.s32.totalorder %s24, 1
      %p110 = por %p108, %p109
      %p112 = scmp.ne.s32.totalorder %s97, %s111
      %p113 = scmp.eq.s32.totalorder %s24, 0
      %p114 = por %p112, %p113
      %s116 = sadd.s32 %s115, 1
      %p119 = scmp.eq.s32.totalorder %s18, 1
      %p120 = scmp.ne.s32.totalorder %s115, %s117
      %p121 = scmp.eq.s32.totalorder %s18, 0
      %p122 = por %p120, %p121
      %p123 = scmp.ne.s32.totalorder %s115, %s117
      %p124 = scmp.eq.s32.totalorder %s23, 1
      %p125 = por %p123, %p124
      %p126 = scmp.ne.s32.totalorder %s117, %s118
      %p127 = scmp.eq.s32.totalorder %s23, 0
      %p128 = por %p126, %p127
      %p129 = scmp.ne.s32.totalorder %s117, %s118
      %p130 = scmp.eq.s32.totalorder %s24, 1
      %p131 = por %p129, %p130
      %p133 = scmp.ne.s32.totalorder %s118, %s132
      %p134 = scmp.eq.s32.totalorder %s24, 0
      %p135 = por %p133, %p134
      %s137 = sadd.s32 %s136, 1
      %p140 = scmp.eq.s32.totalorder %s18, 1
      %p141 = scmp.ne.s32.totalorder %s136, %s138
      %p142 = scmp.eq.s32.totalorder %s18, 0
      %p143 = por %p141, %p142
      %p144 = scmp.ne.s32.totalorder %s136, %s138
      %p145 = scmp.eq.s32.totalorder %s23, 1
      %p146 = por %p144, %p145
      %p147 = scmp.ne.s32.totalorder %s138, %s139
      %p148 = scmp.eq.s32.totalorder %s23, 0
      %p149 = por %p147, %p148
      %p150 = scmp.ne.s32.totalorder %s138, %s139
      %p151 = scmp.eq.s32.totalorder %s24, 1
      %p152 = por %p150, %p151
      %p154 = scmp.ne.s32.totalorder %s139, %s153
      %p155 = scmp.eq.s32.totalorder %s24, 0
      %p156 = por %p154, %p155
      %s158 = sadd.s32 %s157, 1
      %p161 = scmp.eq.s32.totalorder %s18, 1
      %p162 = scmp.ne.s32.totalorder %s157, %s159
      %p163 = scmp.eq.s32.totalorder %s18, 0
      %p164 = por %p162, %p163
      %p165 = scmp.ne.s32.totalorder %s157, %s159
      %p166 = scmp.eq.s32.totalorder %s23, 1
      %p167 = por %p165, %p166
      %p168 = scmp.ne.s32.totalorder %s159, %s160
      %p169 = scmp.eq.s32.totalorder %s23, 0
      %p170 = por %p168, %p169
      %p171 = scmp.ne.s32.totalorder %s159, %s160
      %p172 = scmp.eq.s32.totalorder %s24, 1
      %p173 = por %p171, %p172
      %p175 = scmp.ne.s32.totalorder %s160, %s174
      %p176 = scmp.eq.s32.totalorder %s24, 0
      %p177 = por %p175, %p176
      %s178 = ssub.s32 %s18, %s25
      %p179 = scmp.eq.s32.totalorder %s178, 0
      %s181 = sadd.s32 %s180, 1
      %s182 = scalar_select %p179, %s180, %s181
      %p185 = pneg %p179
      %p186 = scmp.eq.s32.totalorder %s18, 1
      %p187 = por %p185, %p186
      %p188 = scmp.ne.s32.totalorder %s180, %s183
      %p189 = scmp.eq.s32.totalorder %s18, 0
      %p190 = por %p188, %p189
      %p191 = scmp.ne.s32.totalorder %s180, %s183
      %p192 = scmp.eq.s32.totalorder %s23, 1
      %p193 = por %p191, %p192
      %p194 = scmp.ne.s32.totalorder %s183, %s184
      %p195 = scmp.eq.s32.totalorder %s23, 0
      %p196 = por %p194, %p195
      %p197 = scmp.ne.s32.totalorder %s183, %s184
      %p198 = scmp.eq.s32.totalorder %s24, 1
      %p199 = por %p197, %p198
      %p201 = scmp.ne.s32.totalorder %s184, %s200
      %p202 = scmp.eq.s32.totalorder %s24, 0
      %p203 = por %p201, %p202
      %p204 = scmp.le.s32.totalorder 1, %s18
      %p205 = scmp.lt.s32.totalorder %s18, 3
      %p206 = pnand %p204, %p205
      %p207 = pneg %p206
      // Predicated region
      $region9: #{tpu_custom_call.1} parent=5 // pred_check
        _
      $region10: #{tpu_custom_call.1} parent=5 // pred_check_branch
        %209 = sbr.rel (%p206) target = $region12
      $region11: #{tpu_custom_call.1} parent=5 // pred_region
        %s210 = ssub.s32 %s18, 1
        // Predicated region
        $region13: #{tpu_custom_call.1} parent=11 // pred_check
          %p211 = pneg %p65
        $region14: #{tpu_custom_call.1} parent=11 // pred_check_branch
          %213 = sbr.rel (%p211) target = $region16
        $region15: #{tpu_custom_call.1} parent=11 // pred_region
          _
        $region16: #{tpu_custom_call.1} parent=11 // pred_fallthru
          _
        // Predicated region
        $region17: #{tpu_custom_call.1} parent=11 // pred_check
          %p214 = pneg %p86
        $region18: #{tpu_custom_call.1} parent=11 // pred_check_branch
          %216 = sbr.rel (%p214) target = $region20
        $region19: #{tpu_custom_call.1} parent=11 // pred_region
          %s218 = ssub.s32 512, 512
          %219 = vsyncadd [#allocation3], %s218
          %s220 = sshll.u32 [#allocation2], 4
          %s221 = int_to_ptr.vmem [resolvable:$true] %s220
          %226 = dma.hbm_to_vmem [thread:$0]  %s2, 512, %s221, [#allocation3], 128, 128, 8
        $region20: #{tpu_custom_call.1} parent=11 // pred_fallthru
          _
        // Predicated region
        $region21: #{tpu_custom_call.1} parent=11 // pred_check
          %p227 = pneg %p107
        $region22: #{tpu_custom_call.1} parent=11 // pred_check_branch
          %229 = sbr.rel (%p227) target = $region24
        $region23: #{tpu_custom_call.1} parent=11 // pred_region
          %s231 = ssub.s32 512, 512
          %232 = vsyncadd [#allocation6], %s231
          %s233 = sshll.u32 [#allocation5], 4
          %s234 = int_to_ptr.vmem [resolvable:$true] %s233
          %239 = dma.hbm_to_vmem [thread:$0]  %s3, 512, %s234, [#allocation6], 128, 128, 8
        $region24: #{tpu_custom_call.1} parent=11 // pred_fallthru
          _
        // Predicated region
        $region25: #{tpu_custom_call.1} parent=11 // pred_check
          %p240 = pneg %p128
        $region26: #{tpu_custom_call.1} parent=11 // pred_check_branch
          %242 = sbr.rel (%p240) target = $region28
        $region27: #{tpu_custom_call.1} parent=11 // pred_region
          %s244 = ssub.s32 512, 512
          %245 = vsyncadd [#allocation6], %s244
          %s246 = sshll.u32 [#allocation7], 4
          %s247 = int_to_ptr.vmem [resolvable:$true] %s246
          %252 = dma.hbm_to_vmem [thread:$0]  %s4, 512, %s247, [#allocation6], 128, 128, 8
        $region28: #{tpu_custom_call.1} parent=11 // pred_fallthru
          _
        // Predicated region
        $region29: #{tpu_custom_call.1} parent=11 // pred_check
          %p253 = pneg %p149
        $region30: #{tpu_custom_call.1} parent=11 // pred_check_branch
          %255 = sbr.rel (%p253) target = $region32
        $region31: #{tpu_custom_call.1} parent=11 // pred_region
          _
        $region32: #{tpu_custom_call.1} parent=11 // pred_fallthru
          _
        // Predicated region
        $region33: #{tpu_custom_call.1} parent=11 // pred_check
          %p256 = pneg %p170
        $region34: #{tpu_custom_call.1} parent=11 // pred_check_branch
          %258 = sbr.rel (%p256) target = $region36
        $region35: #{tpu_custom_call.1} parent=11 // pred_region
          _
        $region36: #{tpu_custom_call.1} parent=11 // pred_fallthru
          _
      $region12: #{tpu_custom_call.1} parent=5 // pred_fallthru
        _
      %p259 = scmp.lt.s32.totalorder %s18, 2
      // Predicated region
      $region37: #{tpu_custom_call.1} parent=5 // pred_check
        %p260 = pneg %p259
      $region38: #{tpu_custom_call.1} parent=5 // pred_check_branch
        %262 = sbr.rel (%p260) target = $region40
      $region39: #{tpu_custom_call.1} parent=5 // pred_region
        // Predicated region
        $region41: #{tpu_custom_call.1} parent=39 // pred_check
          %p263 = pneg %p38
        $region42: #{tpu_custom_call.1} parent=39 // pred_check_branch
          %265 = sbr.rel (%p263) target = $region44
        $region43: #{tpu_custom_call.1} parent=39 // pred_region
          %s266 = smul.u32 4, %s18
          %p267 = scmp.lt.s32.totalorder %s266, 7
          %s268 = scalar_select %p267, %s266, 7
          %s269 = smul.addr %s268, 8
          %s270 = scalar_lea.vmem %s0, %s269
          %s271 = smul.u32 4, %s18
        $region44: #{tpu_custom_call.1} parent=39 // pred_fallthru
          _
      $region40: #{tpu_custom_call.1} parent=5 // pred_fallthru
        _
      %p272 = scmp.le.s32.totalorder 1, %s18
      %p273 = scmp.lt.s32.totalorder %s18, 3
      %p274 = pnand %p272, %p273
      %p275 = pneg %p274
      // Predicated region
      $region45: #{tpu_custom_call.1} parent=5 // pred_check
        _
      $region46: #{tpu_custom_call.1} parent=5 // pred_check_branch
        %277 = sbr.rel (%p274) target = $region48
      $region47: #{tpu_custom_call.1} parent=5 // pred_region
        %s278 = ssub.s32 %s18, 1
        // Predicated region
        $region49: #{tpu_custom_call.1} parent=47 // pred_check
          %p279 = pneg %p86
        $region50: #{tpu_custom_call.1} parent=47 // pred_check_branch
          %281 = sbr.rel (%p279) target = $region52
        $region51: #{tpu_custom_call.1} parent=47 // pred_region
          %282 = dma.done [#allocation3], 512
        $region52: #{tpu_custom_call.1} parent=47 // pred_fallthru
          _
        // Predicated region
        $region53: #{tpu_custom_call.1} parent=47 // pred_check
          %p283 = pneg %p107
        $region54: #{tpu_custom_call.1} parent=47 // pred_check_branch
          %285 = sbr.rel (%p283) target = $region56
        $region55: #{tpu_custom_call.1} parent=47 // pred_region
          %286 = dma.done [#allocation6], 512
        $region56: #{tpu_custom_call.1} parent=47 // pred_fallthru
          _
        // Predicated region
        $region57: #{tpu_custom_call.1} parent=47 // pred_check
          %p287 = pneg %p128
        $region58: #{tpu_custom_call.1} parent=47 // pred_check_branch
          %289 = sbr.rel (%p287) target = $region60
        $region59: #{tpu_custom_call.1} parent=47 // pred_region
          %290 = dma.done [#allocation6], 512
        $region60: #{tpu_custom_call.1} parent=47 // pred_fallthru
          _
        %s291 = smul.u32 4, %s23
        %p292 = scmp.lt.s32.totalorder %s291, 7
        %s293 = scalar_select %p292, %s291, 7
        %s294 = smul.addr %s293, 8
        %s295 = scalar_lea.vmem %s0, %s294
        %p296 = pneg %p44
        %p297 = pneg %p41
        %p298 = pneg %p65
        %p299 = pneg %p62
        %p300 = pneg %p86
        %p301 = pneg %p83
        %p302 = pneg %p107
        %p303 = pneg %p104
        %p304 = pneg %p128
        %p305 = pneg %p125
        %p306 = pneg %p149
        %p307 = pneg %p146
        %p308 = pneg %p170
        %p309 = pneg %p167
        %p310 = pneg %p196
        %p311 = pneg %p193
        %s312 = sand.u32 %s183, 1
        %s313 = scalar_lea.sflag [#allocation4], %s312
        %s314 = sand.u32 %s183, 1
        %s315 = smul.addr %s314, 4
        %s316 = scalar_lea.vmem [#allocation8], %s315
        %s317 = smul.u32 4, %s23
        %p318 = scmp.lt.s32.totalorder %s317, 7
        %s319 = scalar_select %p318, %s317, 7
        %s320 = smul.addr %s319, 8
        %s321 = scalar_lea.vmem %s0, %s320
        %s322 = smul.u32 4, %s23
        %s323 = smul.u32 4, %s23
        %v324 = vld [vmem:[%s6] sm:$0xff]
        %v325 = vld [vmem:[%s6 + $0x8] sm:$0xff]
        %v326 = vld [vmem:[%s6 + $0x10] sm:$0xff]
        %v327 = vld [vmem:[%s6 + $0x18] sm:$0xff]
        %v328 = vld [vmem:[%s321] sm:$0xff]
        %v329 = vld [vmem:[%s321 + $0x8] sm:$0xff]
        %v330 = vld [vmem:[%s321 + $0x10] sm:$0xff]
        %v331 = vld [vmem:[%s321 + $0x18] sm:$0xff]
        %v332 = vld [vmem:[%s1] sm:$0xff]
        %v333 = vld [vmem:[%s1 + $0x8] sm:$0xff]
        %v334 = vld [vmem:[%s1 + $0x10] sm:$0xff]
        %v335 = vld [vmem:[%s1 + $0x18] sm:$0xff]
        %337 = vset.pattern.permute.xlu0 0
        %338 = vperm.xlu0 %337, %v324
        %v339 = vpop.permute.xlu0 %338
        %342 = vset.pattern.permute.xlu0 0
        %343 = vperm.xlu0 %342, %v325
        %v344 = vpop.permute.xlu0 %343
        %347 = vset.pattern.permute.xlu0 0
        %348 = vperm.xlu0 %347, %v326
        %v349 = vpop.permute.xlu0 %348
        %352 = vset.pattern.permute.xlu0 0
        %353 = vperm.xlu0 %352, %v327
        %v354 = vpop.permute.xlu0 %353
        %vm356 = vcmask 64512
        %v358 = vsel %vm356, %v332, 0
        %v361 = vsel %vm356, %v333, 0
        %v364 = vsel %vm356, %v334, 0
        %v367 = vsel %vm356, %v335, 0
        %369 = vmatprep.subr.mxu0 0.0
        %370 = vmatpush1.msra.mxu0 0.0
        %371 = vmatprep.subr.mxu0 0.0
        %372 = vmatpush1.msra.mxu0 0.0
        %373 = vmatprep.subr.mxu0 0.0
        %374 = vmatpush1.msra.mxu0 0.0
        %375 = vmatprep.subr.mxu0 0.0
        %376 = vmatpush1.msra.mxu0 0.0
        %377 = vmatprep.subr.mxu0 0.0
        %378 = vmatpush1.msra.mxu0 0.0
        %379 = vmatprep.subr.mxu0 0.0
        %380 = vmatpush1.msra.mxu0 0.0
        %381 = vmatprep.subr.mxu0 0.0
        %382 = vmatpush1.msra.mxu0 0.0
        %383 = vmatprep.subr.mxu0 0.0
        %384 = vmatpush1.msra.mxu0 0.0
        %385 = vmatprep.subr.mxu0 0.0
        %386 = vmatpush1.msra.mxu0 0.0
        %387 = vmatprep.subr.mxu0 0.0
        %388 = vmatpush1.msra.mxu0 0.0
        %389 = vmatprep.subr.mxu0 0.0
        %390 = vmatpush1.msra.mxu0 0.0
        %391 = vmatprep.subr.mxu0 0.0
        %392 = vmatpush1.msra.mxu0 0.0
        %393 = vmatprep.subr.mxu0 0.0
        %394 = vmatpush1.msra.mxu0 0.0
        %395 = vmatprep.subr.mxu0 0.0
        %396 = vmatpush1.msra.mxu0 0.0
        %397 = vmatprep.subr.mxu0 0.0
        %398 = vmatpush1.msra.mxu0 0.0
        %399 = vmatprep.subr.mxu0 %v329
        %400 = vmatpush1.msra.mxu0 %v328
        %401 = vmatprep.subr.mxu0 0.0
        %402 = vmatpush2.msra.mxu0 0.0
        %403 = vmatprep.subr.mxu0 0.0
        %404 = vmatpush2.msra.mxu0 0.0
        %405 = vmatprep.subr.mxu0 0.0
        %406 = vmatpush2.msra.mxu0 0.0
        %407 = vmatprep.subr.mxu0 0.0
        %408 = vmatpush2.msra.mxu0 0.0
        %409 = vmatprep.subr.mxu0 0.0
        %410 = vmatpush2.msra.mxu0 0.0
        %411 = vmatprep.subr.mxu0 0.0
        %412 = vmatpush2.msra.mxu0 0.0
        %413 = vmatprep.subr.mxu0 0.0
        %414 = vmatpush2.msra.mxu0 0.0
        %415 = vmatprep.subr.mxu0 0.0
        %416 = vmatpush2.msra.mxu0 0.0
        %417 = vmatprep.subr.mxu0 0.0
        %418 = vmatpush2.msra.mxu0 0.0
        %419 = vmatprep.subr.mxu0 0.0
        %420 = vmatpush2.msra.mxu0 0.0
        %421 = vmatprep.subr.mxu0 0.0
        %422 = vmatpush2.msra.mxu0 0.0
        %423 = vmatprep.subr.mxu0 0.0
        %424 = vmatpush2.msra.mxu0 0.0
        %425 = vmatprep.subr.mxu0 0.0
        %426 = vmatpush2.msra.mxu0 0.0
        %427 = vmatprep.subr.mxu0 0.0
        %428 = vmatpush2.msra.mxu0 0.0
        %429 = vmatprep.subr.mxu0 0.0
        %430 = vmatpush2.msra.mxu0 0.0
        %431 = vmatprep.subr.mxu0 0.0
        %432 = vmatpush2.msra.mxu0 0.0
        %433 = vmatprep.mubr.f32.mxu0 0.0
        %434 = vmatmul.mubr.f32.gmra.mxu0 %v358
        %v435 = vpop.f32.mrf.mxu0
        %v436 = vadd.f32 %v339, %v435
        %v437 = vpop.f32.mrf.mxu0
        %v438 = vadd.f32 %v339, %v437
        %439 = vmatprep.mubr.f32.mxu0 0.0
        %440 = vmatmul.mubr.f32.gmra.mxu0 %v361
        %v441 = vpop.f32.mrf.mxu0
        %v442 = vadd.f32 %v344, %v441
        %v443 = vpop.f32.mrf.mxu0
        %v444 = vadd.f32 %v344, %v443
        %445 = vmatprep.mubr.f32.mxu0 0.0
        %446 = vmatmul.mubr.f32.gmra.mxu0 %v364
        %v447 = vpop.f32.mrf.mxu0
        %v448 = vadd.f32 %v349, %v447
        %v449 = vpop.f32.mrf.mxu0
        %v450 = vadd.f32 %v349, %v449
        %451 = vmatprep.mubr.f32.mxu0 0.0
        %452 = vmatmul.mubr.f32.gmra.mxu0 %v367
        %v453 = vpop.f32.mrf.mxu0
        %v454 = vadd.f32 %v354, %v453
        %v455 = vpop.f32.mrf.mxu0
        %v456 = vadd.f32 %v354, %v455
        %457 = vdwg.mxu0
        %458 = vmatprep.subr.mxu0 0.0
        %459 = vmatpush1.msra.mxu0 0.0
        %460 = vmatprep.subr.mxu0 0.0
        %461 = vmatpush1.msra.mxu0 0.0
        %462 = vmatprep.subr.mxu0 0.0
        %463 = vmatpush1.msra.mxu0 0.0
        %464 = vmatprep.subr.mxu0 0.0
        %465 = vmatpush1.msra.mxu0 0.0
        %466 = vmatprep.subr.mxu0 0.0
        %467 = vmatpush1.msra.mxu0 0.0
        %468 = vmatprep.subr.mxu0 0.0
        %469 = vmatpush1.msra.mxu0 0.0
        %470 = vmatprep.subr.mxu0 0.0
        %471 = vmatpush1.msra.mxu0 0.0
        %472 = vmatprep.subr.mxu0 0.0
        %473 = vmatpush1.msra.mxu0 0.0
        %474 = vmatprep.subr.mxu0 0.0
        %475 = vmatpush1.msra.mxu0 0.0
        %476 = vmatprep.subr.mxu0 0.0
        %477 = vmatpush1.msra.mxu0 0.0
        %478 = vmatprep.subr.mxu0 0.0
        %479 = vmatpush1.msra.mxu0 0.0
        %480 = vmatprep.subr.mxu0 0.0
        %481 = vmatpush1.msra.mxu0 0.0
        %482 = vmatprep.subr.mxu0 0.0
        %483 = vmatpush1.msra.mxu0 0.0
        %484 = vmatprep.subr.mxu0 0.0
        %485 = vmatpush1.msra.mxu0 0.0
        %486 = vmatprep.subr.mxu0 0.0
        %487 = vmatpush1.msra.mxu0 0.0
        %488 = vmatprep.subr.mxu0 %v331
        %489 = vmatpush1.msra.mxu0 %v330
        %490 = vmatprep.subr.mxu0 0.0
        %491 = vmatpush2.msra.mxu0 0.0
        %492 = vmatprep.subr.mxu0 0.0
        %493 = vmatpush2.msra.mxu0 0.0
        %494 = vmatprep.subr.mxu0 0.0
        %495 = vmatpush2.msra.mxu0 0.0
        %496 = vmatprep.subr.mxu0 0.0
        %497 = vmatpush2.msra.mxu0 0.0
        %498 = vmatprep.subr.mxu0 0.0
        %499 = vmatpush2.msra.mxu0 0.0
        %500 = vmatprep.subr.mxu0 0.0
        %501 = vmatpush2.msra.mxu0 0.0
        %502 = vmatprep.subr.mxu0 0.0
        %503 = vmatpush2.msra.mxu0 0.0
        %504 = vmatprep.subr.mxu0 0.0
        %505 = vmatpush2.msra.mxu0 0.0
        %506 = vmatprep.subr.mxu0 0.0
        %507 = vmatpush2.msra.mxu0 0.0
        %508 = vmatprep.subr.mxu0 0.0
        %509 = vmatpush2.msra.mxu0 0.0
        %510 = vmatprep.subr.mxu0 0.0
        %511 = vmatpush2.msra.mxu0 0.0
        %512 = vmatprep.subr.mxu0 0.0
        %513 = vmatpush2.msra.mxu0 0.0
        %514 = vmatprep.subr.mxu0 0.0
        %515 = vmatpush2.msra.mxu0 0.0
        %516 = vmatprep.subr.mxu0 0.0
        %517 = vmatpush2.msra.mxu0 0.0
        %518 = vmatprep.subr.mxu0 0.0
        %519 = vmatpush2.msra.mxu0 0.0
        %520 = vmatprep.subr.mxu0 0.0
        %521 = vmatpush2.msra.mxu0 0.0
        %522 = vmatprep.mubr.f32.mxu0 0.0
        %523 = vmatmul.mubr.f32.gmra.mxu0 %v358
        %v524 = vpop.f32.mrf.mxu0
        %v525 = vadd.f32 %v339, %v524
        %v526 = vpop.f32.mrf.mxu0
        %v527 = vadd.f32 %v339, %v526
        %528 = vmatprep.mubr.f32.mxu0 0.0
        %529 = vmatmul.mubr.f32.gmra.mxu0 %v361
        %v530 = vpop.f32.mrf.mxu0
        %v531 = vadd.f32 %v344, %v530
        %v532 = vpop.f32.mrf.mxu0
        %v533 = vadd.f32 %v344, %v532
        %534 = vmatprep.mubr.f32.mxu0 0.0
        %535 = vmatmul.mubr.f32.gmra.mxu0 %v364
        %v536 = vpop.f32.mrf.mxu0
        %v537 = vadd.f32 %v349, %v536
        %v538 = vpop.f32.mrf.mxu0
        %v539 = vadd.f32 %v349, %v538
        %540 = vmatprep.mubr.f32.mxu0 0.0
        %541 = vmatmul.mubr.f32.gmra.mxu0 %v367
        %v542 = vpop.f32.mrf.mxu0
        %v543 = vadd.f32 %v354, %v542
        %v544 = vpop.f32.mrf.mxu0
        %v545 = vadd.f32 %v354, %v544
        %546 = vdwg.mxu0
        %v547 = vmul.f32 %v436, 100.0
        %v548 = vmul.f32 %v438, 100.0
        %v549 = vmul.f32 %v525, 100.0
        %v550 = vmul.f32 %v527, 100.0
        %v551 = vmul.f32 %v442, 100.0
        %v552 = vmul.f32 %v444, 100.0
        %v553 = vmul.f32 %v531, 100.0
        %v554 = vmul.f32 %v533, 100.0
        %v555 = vmul.f32 %v448, 100.0
        %v556 = vmul.f32 %v450, 100.0
        %v557 = vmul.f32 %v537, 100.0
        %v558 = vmul.f32 %v539, 100.0
        %v559 = vmul.f32 %v454, 100.0
        %v560 = vmul.f32 %v456, 100.0
        %v561 = vmul.f32 %v543, 100.0
        %v562 = vmul.f32 %v545, 100.0
        %v563 = vmin.f32 %v547, 20.0
        %v564 = vmin.f32 %v548, 20.0
        %v565 = vmin.f32 %v549, 20.0
        %v566 = vmin.f32 %v550, 20.0
        %v567 = vmin.f32 %v551, 20.0
        %v568 = vmin.f32 %v552, 20.0
        %v569 = vmin.f32 %v553, 20.0
        %v570 = vmin.f32 %v554, 20.0
        %v571 = vmin.f32 %v555, 20.0
        %v572 = vmin.f32 %v556, 20.0
        %v573 = vmin.f32 %v557, 20.0
        %v574 = vmin.f32 %v558, 20.0
        %v575 = vmin.f32 %v559, 20.0
        %v576 = vmin.f32 %v560, 20.0
        %v577 = vmin.f32 %v561, 20.0
        %v578 = vmin.f32 %v562, 20.0
        %v579 = vmul.f32 %v563, 1.442695
        %v580 = vpow.pop %v579
        %v581 = vmul.f32 %v564, 1.442695
        %v582 = vpow.pop %v581
        %v583 = vmul.f32 %v565, 1.442695
        %v584 = vpow.pop %v583
        %v585 = vmul.f32 %v566, 1.442695
        %v586 = vpow.pop %v585
        %v587 = vmul.f32 %v567, 1.442695
        %v588 = vpow.pop %v587
        %v589 = vmul.f32 %v568, 1.442695
        %v590 = vpow.pop %v589
        %v591 = vmul.f32 %v569, 1.442695
        %v592 = vpow.pop %v591
        %v593 = vmul.f32 %v570, 1.442695
        %v594 = vpow.pop %v593
        %v595 = vmul.f32 %v571, 1.442695
        %v596 = vpow.pop %v595
        %v597 = vmul.f32 %v572, 1.442695
        %v598 = vpow.pop %v597
        %v599 = vmul.f32 %v573, 1.442695
        %v600 = vpow.pop %v599
        %v601 = vmul.f32 %v574, 1.442695
        %v602 = vpow.pop %v601
        %v603 = vmul.f32 %v575, 1.442695
        %v604 = vpow.pop %v603
        %v605 = vmul.f32 %v576, 1.442695
        %v606 = vpow.pop %v605
        %v607 = vmul.f32 %v577, 1.442695
        %v608 = vpow.pop %v607
        %v609 = vmul.f32 %v578, 1.442695
        %v610 = vpow.pop %v609
        %v611 = vadd.f32 %v580, 1.0
        %v612 = vlog2.pop %v611
        %v613 = vmul.f32 %v612, 0.6931472
        %v614 = vmul.f32 -0.5, %v580
        %v615 = vadd.f32 %v614, 1.0
        %v616 = vmul.f32 %v615, %v580
        %v617 = vand.u32 2147483647, %v580
        %vm618 = vcmp.lt.f32.partialorder %v617, 0.0004427343
        %v619 = vsel %vm618, %v616, %v613
        %v620 = vadd.f32 %v582, 1.0
        %v621 = vlog2.pop %v620
        %v622 = vmul.f32 %v621, 0.6931472
        %v623 = vmul.f32 -0.5, %v582
        %v624 = vadd.f32 %v623, 1.0
        %v625 = vmul.f32 %v624, %v582
        %v626 = vand.u32 2147483647, %v582
        %vm627 = vcmp.lt.f32.partialorder %v626, 0.0004427343
        %v628 = vsel %vm627, %v625, %v622
        %v629 = vadd.f32 %v584, 1.0
        %v630 = vlog2.pop %v629
        %v631 = vmul.f32 %v630, 0.6931472
        %v632 = vmul.f32 -0.5, %v584
        %v633 = vadd.f32 %v632, 1.0
        %v634 = vmul.f32 %v633, %v584
        %v635 = vand.u32 2147483647, %v584
        %vm636 = vcmp.lt.f32.partialorder %v635, 0.0004427343
        %v637 = vsel %vm636, %v634, %v631
        %v638 = vadd.f32 %v586, 1.0
        %v639 = vlog2.pop %v638
        %v640 = vmul.f32 %v639, 0.6931472
        %v641 = vmul.f32 -0.5, %v586
        %v642 = vadd.f32 %v641, 1.0
        %v643 = vmul.f32 %v642, %v586
        %v644 = vand.u32 2147483647, %v586
        %vm645 = vcmp.lt.f32.partialorder %v644, 0.0004427343
        %v646 = vsel %vm645, %v643, %v640
        %v647 = vadd.f32 %v588, 1.0
        %v648 = vlog2.pop %v647
        %v649 = vmul.f32 %v648, 0.6931472
        %v650 = vmul.f32 -0.5, %v588
        %v651 = vadd.f32 %v650, 1.0
        %v652 = vmul.f32 %v651, %v588
        %v653 = vand.u32 2147483647, %v588
        %vm654 = vcmp.lt.f32.partialorder %v653, 0.0004427343
        %v655 = vsel %vm654, %v652, %v649
        %v656 = vadd.f32 %v590, 1.0
        %v657 = vlog2.pop %v656
        %v658 = vmul.f32 %v657, 0.6931472
        %v659 = vmul.f32 -0.5, %v590
        %v660 = vadd.f32 %v659, 1.0
        %v661 = vmul.f32 %v660, %v590
        %v662 = vand.u32 2147483647, %v590
        %vm663 = vcmp.lt.f32.partialorder %v662, 0.0004427343
        %v664 = vsel %vm663, %v661, %v658
        %v665 = vadd.f32 %v592, 1.0
        %v666 = vlog2.pop %v665
        %v667 = vmul.f32 %v666, 0.6931472
        %v668 = vmul.f32 -0.5, %v592
        %v669 = vadd.f32 %v668, 1.0
        %v670 = vmul.f32 %v669, %v592
        %v671 = vand.u32 2147483647, %v592
        %vm672 = vcmp.lt.f32.partialorder %v671, 0.0004427343
        %v673 = vsel %vm672, %v670, %v667
        %v674 = vadd.f32 %v594, 1.0
        %v675 = vlog2.pop %v674
        %v676 = vmul.f32 %v675, 0.6931472
        %v677 = vmul.f32 -0.5, %v594
        %v678 = vadd.f32 %v677, 1.0
        %v679 = vmul.f32 %v678, %v594
        %v680 = vand.u32 2147483647, %v594
        %vm681 = vcmp.lt.f32.partialorder %v680, 0.0004427343
        %v682 = vsel %vm681, %v679, %v676
        %v683 = vadd.f32 %v596, 1.0
        %v684 = vlog2.pop %v683
        %v685 = vmul.f32 %v684, 0.6931472
        %v686 = vmul.f32 -0.5, %v596
        %v687 = vadd.f32 %v686, 1.0
        %v688 = vmul.f32 %v687, %v596
        %v689 = vand.u32 2147483647, %v596
        %vm690 = vcmp.lt.f32.partialorder %v689, 0.0004427343
        %v691 = vsel %vm690, %v688, %v685
        %v692 = vadd.f32 %v598, 1.0
        %v693 = vlog2.pop %v692
        %v694 = vmul.f32 %v693, 0.6931472
        %v695 = vmul.f32 -0.5, %v598
        %v696 = vadd.f32 %v695, 1.0
        %v697 = vmul.f32 %v696, %v598
        %v698 = vand.u32 2147483647, %v598
        %vm699 = vcmp.lt.f32.partialorder %v698, 0.0004427343
        %v700 = vsel %vm699, %v697, %v694
        %v701 = vadd.f32 %v600, 1.0
        %v702 = vlog2.pop %v701
        %v703 = vmul.f32 %v702, 0.6931472
        %v704 = vmul.f32 -0.5, %v600
        %v705 = vadd.f32 %v704, 1.0
        %v706 = vmul.f32 %v705, %v600
        %v707 = vand.u32 2147483647, %v600
        %vm708 = vcmp.lt.f32.partialorder %v707, 0.0004427343
        %v709 = vsel %vm708, %v706, %v703
        %v710 = vadd.f32 %v602, 1.0
        %v711 = vlog2.pop %v710
        %v712 = vmul.f32 %v711, 0.6931472
        %v713 = vmul.f32 -0.5, %v602
        %v714 = vadd.f32 %v713, 1.0
        %v715 = vmul.f32 %v714, %v602
        %v716 = vand.u32 2147483647, %v602
        %vm717 = vcmp.lt.f32.partialorder %v716, 0.0004427343
        %v718 = vsel %vm717, %v715, %v712
        %v719 = vadd.f32 %v604, 1.0
        %v720 = vlog2.pop %v719
        %v721 = vmul.f32 %v720, 0.6931472
        %v722 = vmul.f32 -0.5, %v604
        %v723 = vadd.f32 %v722, 1.0
        %v724 = vmul.f32 %v723, %v604
        %v725 = vand.u32 2147483647, %v604
        %vm726 = vcmp.lt.f32.partialorder %v725, 0.0004427343
        %v727 = vsel %vm726, %v724, %v721
        %v728 = vadd.f32 %v606, 1.0
        %v729 = vlog2.pop %v728
        %v730 = vmul.f32 %v729, 0.6931472
        %v731 = vmul.f32 -0.5, %v606
        %v732 = vadd.f32 %v731, 1.0
        %v733 = vmul.f32 %v732, %v606
        %v734 = vand.u32 2147483647, %v606
        %vm735 = vcmp.lt.f32.partialorder %v734, 0.0004427343
        %v736 = vsel %vm735, %v733, %v730
        %v737 = vadd.f32 %v608, 1.0
        %v738 = vlog2.pop %v737
        %v739 = vmul.f32 %v738, 0.6931472
        %v740 = vmul.f32 -0.5, %v608
        %v741 = vadd.f32 %v740, 1.0
        %v742 = vmul.f32 %v741, %v608
        %v743 = vand.u32 2147483647, %v608
        %vm744 = vcmp.lt.f32.partialorder %v743, 0.0004427343
        %v745 = vsel %vm744, %v742, %v739
        %v746 = vadd.f32 %v610, 1.0
        %v747 = vlog2.pop %v746
        %v748 = vmul.f32 %v747, 0.6931472
        %v749 = vmul.f32 -0.5, %v610
        %v750 = vadd.f32 %v749, 1.0
        %v751 = vmul.f32 %v750, %v610
        %v752 = vand.u32 2147483647, %v610
        %vm753 = vcmp.lt.f32.partialorder %v752, 0.0004427343
        %v754 = vsel %vm753, %v751, %v748
        %v755 = vmul.f32 %v619, 0.01
        %v756 = vmul.f32 %v628, 0.01
        %v757 = vmul.f32 %v637, 0.01
        %v758 = vmul.f32 %v646, 0.01
        %v759 = vmul.f32 %v655, 0.01
        %v760 = vmul.f32 %v664, 0.01
        %v761 = vmul.f32 %v673, 0.01
        %v762 = vmul.f32 %v682, 0.01
        %v763 = vmul.f32 %v691, 0.01
        %v764 = vmul.f32 %v700, 0.01
        %v765 = vmul.f32 %v709, 0.01
        %v766 = vmul.f32 %v718, 0.01
        %v767 = vmul.f32 %v727, 0.01
        %v768 = vmul.f32 %v736, 0.01
        %v769 = vmul.f32 %v745, 0.01
        %v770 = vmul.f32 %v754, 0.01
        %vm771 = vcmp.gt.f32.partialorder %v547, 20.0
        %vm772 = vcmp.gt.f32.partialorder %v548, 20.0
        %vm773 = vcmp.gt.f32.partialorder %v549, 20.0
        %vm774 = vcmp.gt.f32.partialorder %v550, 20.0
        %vm775 = vcmp.gt.f32.partialorder %v551, 20.0
        %vm776 = vcmp.gt.f32.partialorder %v552, 20.0
        %vm777 = vcmp.gt.f32.partialorder %v553, 20.0
        %vm778 = vcmp.gt.f32.partialorder %v554, 20.0
        %vm779 = vcmp.gt.f32.partialorder %v555, 20.0
        %vm780 = vcmp.gt.f32.partialorder %v556, 20.0
        %vm781 = vcmp.gt.f32.partialorder %v557, 20.0
        %vm782 = vcmp.gt.f32.partialorder %v558, 20.0
        %vm783 = vcmp.gt.f32.partialorder %v559, 20.0
        %vm784 = vcmp.gt.f32.partialorder %v560, 20.0
        %vm785 = vcmp.gt.f32.partialorder %v561, 20.0
        %vm786 = vcmp.gt.f32.partialorder %v562, 20.0
        %v787 = vsel %vm771, %v436, %v755
        %v788 = vsel %vm772, %v438, %v756
        %v789 = vsel %vm773, %v525, %v757
        %v790 = vsel %vm774, %v527, %v758
        %v791 = vsel %vm775, %v442, %v759
        %v792 = vsel %vm776, %v444, %v760
        %v793 = vsel %vm777, %v531, %v761
        %v794 = vsel %vm778, %v533, %v762
        %v795 = vsel %vm779, %v448, %v763
        %v796 = vsel %vm780, %v450, %v764
        %v797 = vsel %vm781, %v537, %v765
        %v798 = vsel %vm782, %v539, %v766
        %v799 = vsel %vm783, %v454, %v767
        %v800 = vsel %vm784, %v456, %v768
        %v801 = vsel %vm785, %v543, %v769
        %v802 = vsel %vm786, %v545, %v770
        %v803 = vld [vmem:[#allocation2] sm:$0xff]
        %v804 = vld [vmem:[#allocation2 + $0x8] sm:$0xff]
        %v805 = vld [vmem:[#allocation2 + $0x10] sm:$0xff]
        %v806 = vld [vmem:[#allocation2 + $0x18] sm:$0x1f]
        %807 = vset.pattern.permute.xlu0 1
        %808 = vperm.xlu0 %807, %v324
        %v809 = vpop.permute.xlu0 %808
        %811 = vset.pattern.permute.xlu0 1
        %812 = vperm.xlu0 %811, %v325
        %v813 = vpop.permute.xlu0 %812
        %815 = vset.pattern.permute.xlu0 1
        %816 = vperm.xlu0 %815, %v326
        %v817 = vpop.permute.xlu0 %816
        %819 = vset.pattern.permute.xlu0 1
        %820 = vperm.xlu0 %819, %v327
        %v821 = vpop.permute.xlu0 %820
        %vm823 = vcmask 261120
        %v825 = vsel %vm823, %v803, 0
        %v828 = vsel %vm823, %v804, 0
        %v831 = vsel %vm823, %v805, 0
        %v834 = vsel %vm823, %v806, 0
        %836 = vmatprep.subr.mxu0 0.0
        %837 = vmatpush1.msra.mxu0 0.0
        %838 = vmatprep.subr.mxu0 0.0
        %839 = vmatpush1.msra.mxu0 0.0
        %840 = vmatprep.subr.mxu0 0.0
        %841 = vmatpush1.msra.mxu0 0.0
        %842 = vmatprep.subr.mxu0 0.0
        %843 = vmatpush1.msra.mxu0 0.0
        %844 = vmatprep.subr.mxu0 0.0
        %845 = vmatpush1.msra.mxu0 0.0
        %846 = vmatprep.subr.mxu0 0.0
        %847 = vmatpush1.msra.mxu0 0.0
        %848 = vmatprep.subr.mxu0 0.0
        %849 = vmatpush1.msra.mxu0 0.0
        %850 = vmatprep.subr.mxu0 0.0
        %851 = vmatpush1.msra.mxu0 0.0
        %852 = vmatprep.subr.mxu0 0.0
        %853 = vmatpush1.msra.mxu0 0.0
        %854 = vmatprep.subr.mxu0 0.0
        %855 = vmatpush1.msra.mxu0 0.0
        %856 = vmatprep.subr.mxu0 0.0
        %857 = vmatpush1.msra.mxu0 0.0
        %858 = vmatprep.subr.mxu0 0.0
        %859 = vmatpush1.msra.mxu0 0.0
        %860 = vmatprep.subr.mxu0 %v800
        %861 = vmatpush1.msra.mxu0 %v799
        %862 = vmatprep.subr.mxu0 %v796
        %863 = vmatpush1.msra.mxu0 %v795
        %864 = vmatprep.subr.mxu0 %v792
        %865 = vmatpush1.msra.mxu0 %v791
        %866 = vmatprep.subr.mxu0 %v788
        %867 = vmatpush1.msra.mxu0 %v787
        %868 = vmatprep.subr.mxu0 0.0
        %869 = vmatpush2.msra.mxu0 0.0
        %870 = vmatprep.subr.mxu0 0.0
        %871 = vmatpush2.msra.mxu0 0.0
        %872 = vmatprep.subr.mxu0 0.0
        %873 = vmatpush2.msra.mxu0 0.0
        %874 = vmatprep.subr.mxu0 0.0
        %875 = vmatpush2.msra.mxu0 0.0
        %876 = vmatprep.subr.mxu0 0.0
        %877 = vmatpush2.msra.mxu0 0.0
        %878 = vmatprep.subr.mxu0 0.0
        %879 = vmatpush2.msra.mxu0 0.0
        %880 = vmatprep.subr.mxu0 0.0
        %881 = vmatpush2.msra.mxu0 0.0
        %882 = vmatprep.subr.mxu0 0.0
        %883 = vmatpush2.msra.mxu0 0.0
        %884 = vmatprep.subr.mxu0 0.0
        %885 = vmatpush2.msra.mxu0 0.0
        %886 = vmatprep.subr.mxu0 0.0
        %887 = vmatpush2.msra.mxu0 0.0
        %888 = vmatprep.subr.mxu0 0.0
        %889 = vmatpush2.msra.mxu0 0.0
        %890 = vmatprep.subr.mxu0 0.0
        %891 = vmatpush2.msra.mxu0 0.0
        %892 = vmatprep.subr.mxu0 0.0
        %893 = vmatpush2.msra.mxu0 0.0
        %894 = vmatprep.subr.mxu0 0.0
        %895 = vmatpush2.msra.mxu0 0.0
        %896 = vmatprep.subr.mxu0 0.0
        %897 = vmatpush2.msra.mxu0 0.0
        %898 = vmatprep.subr.mxu0 0.0
        %899 = vmatpush2.msra.mxu0 0.0
        %900 = vmatprep.mubr.f32.mxu0 0.0
        %901 = vmatmul.mubr.f32.gmra.mxu0 %v825
        %v902 = vpop.f32.mrf.mxu0
        %v903 = vadd.f32 %v809, %v902
        %v904 = vpop.f32.mrf.mxu0
        %v905 = vadd.f32 %v809, %v904
        %906 = vmatprep.mubr.f32.mxu0 0.0
        %907 = vmatmul.mubr.f32.gmra.mxu0 %v828
        %v908 = vpop.f32.mrf.mxu0
        %v909 = vadd.f32 %v813, %v908
        %v910 = vpop.f32.mrf.mxu0
        %v911 = vadd.f32 %v813, %v910
        %912 = vmatprep.mubr.f32.mxu0 0.0
        %913 = vmatmul.mubr.f32.gmra.mxu0 %v831
        %v914 = vpop.f32.mrf.mxu0
        %v915 = vadd.f32 %v817, %v914
        %v916 = vpop.f32.mrf.mxu0
        %v917 = vadd.f32 %v817, %v916
        %918 = vmatprep.mubr.f32.mxu0 0.0
        %919 = vmatmul.mubr.f32.gmra.mxu0 %v834
        %v920 = vpop.f32.mrf.mxu0
        %v921 = vadd.f32 %v821, %v920
        %v922 = vpop.f32.mrf.mxu0
        %v923 = vadd.f32 %v821, %v922
        %924 = vdwg.mxu0
        %925 = vmatprep.subr.mxu0 0.0
        %926 = vmatpush1.msra.mxu0 0.0
        %927 = vmatprep.subr.mxu0 0.0
        %928 = vmatpush1.msra.mxu0 0.0
        %929 = vmatprep.subr.mxu0 0.0
        %930 = vmatpush1.msra.mxu0 0.0
        %931 = vmatprep.subr.mxu0 0.0
        %932 = vmatpush1.msra.mxu0 0.0
        %933 = vmatprep.subr.mxu0 0.0
        %934 = vmatpush1.msra.mxu0 0.0
        %935 = vmatprep.subr.mxu0 0.0
        %936 = vmatpush1.msra.mxu0 0.0
        %937 = vmatprep.subr.mxu0 0.0
        %938 = vmatpush1.msra.mxu0 0.0
        %939 = vmatprep.subr.mxu0 0.0
        %940 = vmatpush1.msra.mxu0 0.0
        %941 = vmatprep.subr.mxu0 0.0
        %942 = vmatpush1.msra.mxu0 0.0
        %943 = vmatprep.subr.mxu0 0.0
        %944 = vmatpush1.msra.mxu0 0.0
        %945 = vmatprep.subr.mxu0 0.0
        %946 = vmatpush1.msra.mxu0 0.0
        %947 = vmatprep.subr.mxu0 0.0
        %948 = vmatpush1.msra.mxu0 0.0
        %949 = vmatprep.subr.mxu0 %v802
        %950 = vmatpush1.msra.mxu0 %v801
        %951 = vmatprep.subr.mxu0 %v798
        %952 = vmatpush1.msra.mxu0 %v797
        %953 = vmatprep.subr.mxu0 %v794
        %954 = vmatpush1.msra.mxu0 %v793
        %955 = vmatprep.subr.mxu0 %v790
        %956 = vmatpush1.msra.mxu0 %v789
        %957 = vmatprep.subr.mxu0 0.0
        %958 = vmatpush2.msra.mxu0 0.0
        %959 = vmatprep.subr.mxu0 0.0
        %960 = vmatpush2.msra.mxu0 0.0
        %961 = vmatprep.subr.mxu0 0.0
        %962 = vmatpush2.msra.mxu0 0.0
        %963 = vmatprep.subr.mxu0 0.0
        %964 = vmatpush2.msra.mxu0 0.0
        %965 = vmatprep.subr.mxu0 0.0
        %966 = vmatpush2.msra.mxu0 0.0
        %967 = vmatprep.subr.mxu0 0.0
        %968 = vmatpush2.msra.mxu0 0.0
        %969 = vmatprep.subr.mxu0 0.0
        %970 = vmatpush2.msra.mxu0 0.0
        %971 = vmatprep.subr.mxu0 0.0
        %972 = vmatpush2.msra.mxu0 0.0
        %973 = vmatprep.subr.mxu0 0.0
        %974 = vmatpush2.msra.mxu0 0.0
        %975 = vmatprep.subr.mxu0 0.0
        %976 = vmatpush2.msra.mxu0 0.0
        %977 = vmatprep.subr.mxu0 0.0
        %978 = vmatpush2.msra.mxu0 0.0
        %979 = vmatprep.subr.mxu0 0.0
        %980 = vmatpush2.msra.mxu0 0.0
        %981 = vmatprep.subr.mxu0 0.0
        %982 = vmatpush2.msra.mxu0 0.0
        %983 = vmatprep.subr.mxu0 0.0
        %984 = vmatpush2.msra.mxu0 0.0
        %985 = vmatprep.subr.mxu0 0.0
        %986 = vmatpush2.msra.mxu0 0.0
        %987 = vmatprep.subr.mxu0 0.0
        %988 = vmatpush2.msra.mxu0 0.0
        %989 = vmatprep.mubr.f32.mxu0 0.0
        %990 = vmatmul.mubr.f32.gmra.mxu0 %v825
        %v991 = vpop.f32.mrf.mxu0
        %v992 = vadd.f32 %v809, %v991
        %v993 = vpop.f32.mrf.mxu0
        %v994 = vadd.f32 %v809, %v993
        %995 = vmatprep.mubr.f32.mxu0 0.0
        %996 = vmatmul.mubr.f32.gmra.mxu0 %v828
        %v997 = vpop.f32.mrf.mxu0
        %v998 = vadd.f32 %v813, %v997
        %v999 = vpop.f32.mrf.mxu0
        %v1000 = vadd.f32 %v813, %v999
        %1001 = vmatprep.mubr.f32.mxu0 0.0
        %1002 = vmatmul.mubr.f32.gmra.mxu0 %v831
        %v1003 = vpop.f32.mrf.mxu0
        %v1004 = vadd.f32 %v817, %v1003
        %v1005 = vpop.f32.mrf.mxu0
        %v1006 = vadd.f32 %v817, %v1005
        %1007 = vmatprep.mubr.f32.mxu0 0.0
        %1008 = vmatmul.mubr.f32.gmra.mxu0 %v834
        %v1009 = vpop.f32.mrf.mxu0
        %v1010 = vadd.f32 %v821, %v1009
        %v1011 = vpop.f32.mrf.mxu0
        %v1012 = vadd.f32 %v821, %v1011
        %1013 = vdwg.mxu0
        %v1014 = vmul.f32 %v903, 100.0
        %v1015 = vmul.f32 %v905, 100.0
        %v1016 = vmul.f32 %v992, 100.0
        %v1017 = vmul.f32 %v994, 100.0
        %v1018 = vmul.f32 %v909, 100.0
        %v1019 = vmul.f32 %v911, 100.0
        %v1020 = vmul.f32 %v998, 100.0
        %v1021 = vmul.f32 %v1000, 100.0
        %v1022 = vmul.f32 %v915, 100.0
        %v1023 = vmul.f32 %v917, 100.0
        %v1024 = vmul.f32 %v1004, 100.0
        %v1025 = vmul.f32 %v1006, 100.0
        %v1026 = vmul.f32 %v921, 100.0
        %v1027 = vmul.f32 %v923, 100.0
        %v1028 = vmul.f32 %v1010, 100.0
        %v1029 = vmul.f32 %v1012, 100.0
        %v1030 = vmin.f32 %v1014, 20.0
        %v1031 = vmin.f32 %v1015, 20.0
        %v1032 = vmin.f32 %v1016, 20.0
        %v1033 = vmin.f32 %v1017, 20.0
        %v1034 = vmin.f32 %v1018, 20.0
        %v1035 = vmin.f32 %v1019, 20.0
        %v1036 = vmin.f32 %v1020, 20.0
        %v1037 = vmin.f32 %v1021, 20.0
        %v1038 = vmin.f32 %v1022, 20.0
        %v1039 = vmin.f32 %v1023, 20.0
        %v1040 = vmin.f32 %v1024, 20.0
        %v1041 = vmin.f32 %v1025, 20.0
        %v1042 = vmin.f32 %v1026, 20.0
        %v1043 = vmin.f32 %v1027, 20.0
        %v1044 = vmin.f32 %v1028, 20.0
        %v1045 = vmin.f32 %v1029, 20.0
        %v1046 = vmul.f32 %v1030, 1.442695
        %v1047 = vpow.pop %v1046
        %v1048 = vmul.f32 %v1031, 1.442695
        %v1049 = vpow.pop %v1048
        %v1050 = vmul.f32 %v1032, 1.442695
        %v1051 = vpow.pop %v1050
        %v1052 = vmul.f32 %v1033, 1.442695
        %v1053 = vpow.pop %v1052
        %v1054 = vmul.f32 %v1034, 1.442695
        %v1055 = vpow.pop %v1054
        %v1056 = vmul.f32 %v1035, 1.442695
        %v1057 = vpow.pop %v1056
        %v1058 = vmul.f32 %v1036, 1.442695
        %v1059 = vpow.pop %v1058
        %v1060 = vmul.f32 %v1037, 1.442695
        %v1061 = vpow.pop %v1060
        %v1062 = vmul.f32 %v1038, 1.442695
        %v1063 = vpow.pop %v1062
        %v1064 = vmul.f32 %v1039, 1.442695
        %v1065 = vpow.pop %v1064
        %v1066 = vmul.f32 %v1040, 1.442695
        %v1067 = vpow.pop %v1066
        %v1068 = vmul.f32 %v1041, 1.442695
        %v1069 = vpow.pop %v1068
        %v1070 = vmul.f32 %v1042, 1.442695
        %v1071 = vpow.pop %v1070
        %v1072 = vmul.f32 %v1043, 1.442695
        %v1073 = vpow.pop %v1072
        %v1074 = vmul.f32 %v1044, 1.442695
        %v1075 = vpow.pop %v1074
        %v1076 = vmul.f32 %v1045, 1.442695
        %v1077 = vpow.pop %v1076
        %v1078 = vadd.f32 %v1047, 1.0
        %v1079 = vlog2.pop %v1078
        %v1080 = vmul.f32 %v1079, 0.6931472
        %v1081 = vmul.f32 -0.5, %v1047
        %v1082 = vadd.f32 %v1081, 1.0
        %v1083 = vmul.f32 %v1082, %v1047
        %v1084 = vand.u32 2147483647, %v1047
        %vm1085 = vcmp.lt.f32.partialorder %v1084, 0.0004427343
        %v1086 = vsel %vm1085, %v1083, %v1080
        %v1087 = vadd.f32 %v1049, 1.0
        %v1088 = vlog2.pop %v1087
        %v1089 = vmul.f32 %v1088, 0.6931472
        %v1090 = vmul.f32 -0.5, %v1049
        %v1091 = vadd.f32 %v1090, 1.0
        %v1092 = vmul.f32 %v1091, %v1049
        %v1093 = vand.u32 2147483647, %v1049
        %vm1094 = vcmp.lt.f32.partialorder %v1093, 0.0004427343
        %v1095 = vsel %vm1094, %v1092, %v1089
        %v1096 = vadd.f32 %v1051, 1.0
        %v1097 = vlog2.pop %v1096
        %v1098 = vmul.f32 %v1097, 0.6931472
        %v1099 = vmul.f32 -0.5, %v1051
        %v1100 = vadd.f32 %v1099, 1.0
        %v1101 = vmul.f32 %v1100, %v1051
        %v1102 = vand.u32 2147483647, %v1051
        %vm1103 = vcmp.lt.f32.partialorder %v1102, 0.0004427343
        %v1104 = vsel %vm1103, %v1101, %v1098
        %v1105 = vadd.f32 %v1053, 1.0
        %v1106 = vlog2.pop %v1105
        %v1107 = vmul.f32 %v1106, 0.6931472
        %v1108 = vmul.f32 -0.5, %v1053
        %v1109 = vadd.f32 %v1108, 1.0
        %v1110 = vmul.f32 %v1109, %v1053
        %v1111 = vand.u32 2147483647, %v1053
        %vm1112 = vcmp.lt.f32.partialorder %v1111, 0.0004427343
        %v1113 = vsel %vm1112, %v1110, %v1107
        %v1114 = vadd.f32 %v1055, 1.0
        %v1115 = vlog2.pop %v1114
        %v1116 = vmul.f32 %v1115, 0.6931472
        %v1117 = vmul.f32 -0.5, %v1055
        %v1118 = vadd.f32 %v1117, 1.0
        %v1119 = vmul.f32 %v1118, %v1055
        %v1120 = vand.u32 2147483647, %v1055
        %vm1121 = vcmp.lt.f32.partialorder %v1120, 0.0004427343
        %v1122 = vsel %vm1121, %v1119, %v1116
        %v1123 = vadd.f32 %v1057, 1.0
        %v1124 = vlog2.pop %v1123
        %v1125 = vmul.f32 %v1124, 0.6931472
        %v1126 = vmul.f32 -0.5, %v1057
        %v1127 = vadd.f32 %v1126, 1.0
        %v1128 = vmul.f32 %v1127, %v1057
        %v1129 = vand.u32 2147483647, %v1057
        %vm1130 = vcmp.lt.f32.partialorder %v1129, 0.0004427343
        %v1131 = vsel %vm1130, %v1128, %v1125
        %v1132 = vadd.f32 %v1059, 1.0
        %v1133 = vlog2.pop %v1132
        %v1134 = vmul.f32 %v1133, 0.6931472
        %v1135 = vmul.f32 -0.5, %v1059
        %v1136 = vadd.f32 %v1135, 1.0
        %v1137 = vmul.f32 %v1136, %v1059
        %v1138 = vand.u32 2147483647, %v1059
        %vm1139 = vcmp.lt.f32.partialorder %v1138, 0.0004427343
        %v1140 = vsel %vm1139, %v1137, %v1134
        %v1141 = vadd.f32 %v1061, 1.0
        %v1142 = vlog2.pop %v1141
        %v1143 = vmul.f32 %v1142, 0.6931472
        %v1144 = vmul.f32 -0.5, %v1061
        %v1145 = vadd.f32 %v1144, 1.0
        %v1146 = vmul.f32 %v1145, %v1061
        %v1147 = vand.u32 2147483647, %v1061
        %vm1148 = vcmp.lt.f32.partialorder %v1147, 0.0004427343
        %v1149 = vsel %vm1148, %v1146, %v1143
        %v1150 = vadd.f32 %v1063, 1.0
        %v1151 = vlog2.pop %v1150
        %v1152 = vmul.f32 %v1151, 0.6931472
        %v1153 = vmul.f32 -0.5, %v1063
        %v1154 = vadd.f32 %v1153, 1.0
        %v1155 = vmul.f32 %v1154, %v1063
        %v1156 = vand.u32 2147483647, %v1063
        %vm1157 = vcmp.lt.f32.partialorder %v1156, 0.0004427343
        %v1158 = vsel %vm1157, %v1155, %v1152
        %v1159 = vadd.f32 %v1065, 1.0
        %v1160 = vlog2.pop %v1159
        %v1161 = vmul.f32 %v1160, 0.6931472
        %v1162 = vmul.f32 -0.5, %v1065
        %v1163 = vadd.f32 %v1162, 1.0
        %v1164 = vmul.f32 %v1163, %v1065
        %v1165 = vand.u32 2147483647, %v1065
        %vm1166 = vcmp.lt.f32.partialorder %v1165, 0.0004427343
        %v1167 = vsel %vm1166, %v1164, %v1161
        %v1168 = vadd.f32 %v1067, 1.0
        %v1169 = vlog2.pop %v1168
        %v1170 = vmul.f32 %v1169, 0.6931472
        %v1171 = vmul.f32 -0.5, %v1067
        %v1172 = vadd.f32 %v1171, 1.0
        %v1173 = vmul.f32 %v1172, %v1067
        %v1174 = vand.u32 2147483647, %v1067
        %vm1175 = vcmp.lt.f32.partialorder %v1174, 0.0004427343
        %v1176 = vsel %vm1175, %v1173, %v1170
        %v1177 = vadd.f32 %v1069, 1.0
        %v1178 = vlog2.pop %v1177
        %v1179 = vmul.f32 %v1178, 0.6931472
        %v1180 = vmul.f32 -0.5, %v1069
        %v1181 = vadd.f32 %v1180, 1.0
        %v1182 = vmul.f32 %v1181, %v1069
        %v1183 = vand.u32 2147483647, %v1069
        %vm1184 = vcmp.lt.f32.partialorder %v1183, 0.0004427343
        %v1185 = vsel %vm1184, %v1182, %v1179
        %v1186 = vadd.f32 %v1071, 1.0
        %v1187 = vlog2.pop %v1186
        %v1188 = vmul.f32 %v1187, 0.6931472
        %v1189 = vmul.f32 -0.5, %v1071
        %v1190 = vadd.f32 %v1189, 1.0
        %v1191 = vmul.f32 %v1190, %v1071
        %v1192 = vand.u32 2147483647, %v1071
        %vm1193 = vcmp.lt.f32.partialorder %v1192, 0.0004427343
        %v1194 = vsel %vm1193, %v1191, %v1188
        %v1195 = vadd.f32 %v1073, 1.0
        %v1196 = vlog2.pop %v1195
        %v1197 = vmul.f32 %v1196, 0.6931472
        %v1198 = vmul.f32 -0.5, %v1073
        %v1199 = vadd.f32 %v1198, 1.0
        %v1200 = vmul.f32 %v1199, %v1073
        %v1201 = vand.u32 2147483647, %v1073
        %vm1202 = vcmp.lt.f32.partialorder %v1201, 0.0004427343
        %v1203 = vsel %vm1202, %v1200, %v1197
        %v1204 = vadd.f32 %v1075, 1.0
        %v1205 = vlog2.pop %v1204
        %v1206 = vmul.f32 %v1205, 0.6931472
        %v1207 = vmul.f32 -0.5, %v1075
        %v1208 = vadd.f32 %v1207, 1.0
        %v1209 = vmul.f32 %v1208, %v1075
        %v1210 = vand.u32 2147483647, %v1075
        %vm1211 = vcmp.lt.f32.partialorder %v1210, 0.0004427343
        %v1212 = vsel %vm1211, %v1209, %v1206
        %v1213 = vadd.f32 %v1077, 1.0
        %v1214 = vlog2.pop %v1213
        %v1215 = vmul.f32 %v1214, 0.6931472
        %v1216 = vmul.f32 -0.5, %v1077
        %v1217 = vadd.f32 %v1216, 1.0
        %v1218 = vmul.f32 %v1217, %v1077
        %v1219 = vand.u32 2147483647, %v1077
        %vm1220 = vcmp.lt.f32.partialorder %v1219, 0.0004427343
        %v1221 = vsel %vm1220, %v1218, %v1215
        %v1222 = vmul.f32 %v1086, 0.01
        %v1223 = vmul.f32 %v1095, 0.01
        %v1224 = vmul.f32 %v1104, 0.01
        %v1225 = vmul.f32 %v1113, 0.01
        %v1226 = vmul.f32 %v1122, 0.01
        %v1227 = vmul.f32 %v1131, 0.01
        %v1228 = vmul.f32 %v1140, 0.01
        %v1229 = vmul.f32 %v1149, 0.01
        %v1230 = vmul.f32 %v1158, 0.01
        %v1231 = vmul.f32 %v1167, 0.01
        %v1232 = vmul.f32 %v1176, 0.01
        %v1233 = vmul.f32 %v1185, 0.01
        %v1234 = vmul.f32 %v1194, 0.01
        %v1235 = vmul.f32 %v1203, 0.01
        %v1236 = vmul.f32 %v1212, 0.01
        %v1237 = vmul.f32 %v1221, 0.01
        %vm1238 = vcmp.gt.f32.partialorder %v1014, 20.0
        %vm1239 = vcmp.gt.f32.partialorder %v1015, 20.0
        %vm1240 = vcmp.gt.f32.partialorder %v1016, 20.0
        %vm1241 = vcmp.gt.f32.partialorder %v1017, 20.0
        %vm1242 = vcmp.gt.f32.partialorder %v1018, 20.0
        %vm1243 = vcmp.gt.f32.partialorder %v1019, 20.0
        %vm1244 = vcmp.gt.f32.partialorder %v1020, 20.0
        %vm1245 = vcmp.gt.f32.partialorder %v1021, 20.0
        %vm1246 = vcmp.gt.f32.partialorder %v1022, 20.0
        %vm1247 = vcmp.gt.f32.partialorder %v1023, 20.0
        %vm1248 = vcmp.gt.f32.partialorder %v1024, 20.0
        %vm1249 = vcmp.gt.f32.partialorder %v1025, 20.0
        %vm1250 = vcmp.gt.f32.partialorder %v1026, 20.0
        %vm1251 = vcmp.gt.f32.partialorder %v1027, 20.0
        %vm1252 = vcmp.gt.f32.partialorder %v1028, 20.0
        %vm1253 = vcmp.gt.f32.partialorder %v1029, 20.0
        %v1254 = vsel %vm1238, %v903, %v1222
        %v1255 = vsel %vm1239, %v905, %v1223
        %v1256 = vsel %vm1240, %v992, %v1224
        %v1257 = vsel %vm1241, %v994, %v1225
        %v1258 = vsel %vm1242, %v909, %v1226
        %v1259 = vsel %vm1243, %v911, %v1227
        %v1260 = vsel %vm1244, %v998, %v1228
        %v1261 = vsel %vm1245, %v1000, %v1229
        %v1262 = vsel %vm1246, %v915, %v1230
        %v1263 = vsel %vm1247, %v917, %v1231
        %v1264 = vsel %vm1248, %v1004, %v1232
        %v1265 = vsel %vm1249, %v1006, %v1233
        %v1266 = vsel %vm1250, %v921, %v1234
        %v1267 = vsel %vm1251, %v923, %v1235
        %v1268 = vsel %vm1252, %v1010, %v1236
        %v1269 = vsel %vm1253, %v1012, %v1237
        %v1270 = vld [vmem:[#allocation5] sm:$0xff]
        %v1271 = vld [vmem:[#allocation5 + $0x8] sm:$0xff]
        %v1272 = vld [vmem:[#allocation5 + $0x10] sm:$0xff]
        %v1273 = vld [vmem:[#allocation5 + $0x18] sm:$0xff]
        %1278 = vrot.lane.b32.xlu0 %v1270, 99
        %v1279 = vpop.permute.xlu0 %1278
        %1280 = vrot.lane.b32.xlu0 %v1271, 99
        %v1281 = vpop.permute.xlu0 %1280
        %1282 = vrot.lane.b32.xlu0 %v1272, 99
        %v1283 = vpop.permute.xlu0 %1282
        %1284 = vrot.lane.b32.xlu0 %v1273, 99
        %v1285 = vpop.permute.xlu0 %1284
        %v1286 = vsel %vm356, %v1279, 0
        %v1288 = vsel %vm356, %v1281, 0
        %v1290 = vsel %vm356, %v1283, 0
        %v1292 = vsel %vm356, %v1285, 0
        %1294 = vmatprep.subr.mxu0 0.0
        %1295 = vmatpush1.msra.mxu0 0.0
        %1296 = vmatprep.subr.mxu0 0.0
        %1297 = vmatpush1.msra.mxu0 0.0
        %1298 = vmatprep.subr.mxu0 0.0
        %1299 = vmatpush1.msra.mxu0 0.0
        %1300 = vmatprep.subr.mxu0 0.0
        %1301 = vmatpush1.msra.mxu0 0.0
        %1302 = vmatprep.subr.mxu0 0.0
        %1303 = vmatpush1.msra.mxu0 0.0
        %1304 = vmatprep.subr.mxu0 0.0
        %1305 = vmatpush1.msra.mxu0 0.0
        %1306 = vmatprep.subr.mxu0 0.0
        %1307 = vmatpush1.msra.mxu0 0.0
        %1308 = vmatprep.subr.mxu0 0.0
        %1309 = vmatpush1.msra.mxu0 0.0
        %1310 = vmatprep.subr.mxu0 0.0
        %1311 = vmatpush1.msra.mxu0 0.0
        %1312 = vmatprep.subr.mxu0 0.0
        %1313 = vmatpush1.msra.mxu0 0.0
        %1314 = vmatprep.subr.mxu0 0.0
        %1315 = vmatpush1.msra.mxu0 0.0
        %1316 = vmatprep.subr.mxu0 0.0
        %1317 = vmatpush1.msra.mxu0 0.0
        %1318 = vmatprep.subr.mxu0 0.0
        %1319 = vmatpush1.msra.mxu0 0.0
        %1320 = vmatprep.subr.mxu0 0.0
        %1321 = vmatpush1.msra.mxu0 0.0
        %1322 = vmatprep.subr.mxu0 0.0
        %1323 = vmatpush1.msra.mxu0 0.0
        %1324 = vmatprep.subr.mxu0 %v329
        %1325 = vmatpush1.msra.mxu0 %v328
        %1326 = vmatprep.subr.mxu0 0.0
        %1327 = vmatpush2.msra.mxu0 0.0
        %1328 = vmatprep.subr.mxu0 0.0
        %1329 = vmatpush2.msra.mxu0 0.0
        %1330 = vmatprep.subr.mxu0 0.0
        %1331 = vmatpush2.msra.mxu0 0.0
        %1332 = vmatprep.subr.mxu0 0.0
        %1333 = vmatpush2.msra.mxu0 0.0
        %1334 = vmatprep.subr.mxu0 0.0
        %1335 = vmatpush2.msra.mxu0 0.0
        %1336 = vmatprep.subr.mxu0 0.0
        %1337 = vmatpush2.msra.mxu0 0.0
        %1338 = vmatprep.subr.mxu0 0.0
        %1339 = vmatpush2.msra.mxu0 0.0
        %1340 = vmatprep.subr.mxu0 0.0
        %1341 = vmatpush2.msra.mxu0 0.0
        %1342 = vmatprep.subr.mxu0 0.0
        %1343 = vmatpush2.msra.mxu0 0.0
        %1344 = vmatprep.subr.mxu0 0.0
        %1345 = vmatpush2.msra.mxu0 0.0
        %1346 = vmatprep.subr.mxu0 0.0
        %1347 = vmatpush2.msra.mxu0 0.0
        %1348 = vmatprep.subr.mxu0 0.0
        %1349 = vmatpush2.msra.mxu0 0.0
        %1350 = vmatprep.subr.mxu0 0.0
        %1351 = vmatpush2.msra.mxu0 0.0
        %1352 = vmatprep.subr.mxu0 0.0
        %1353 = vmatpush2.msra.mxu0 0.0
        %1354 = vmatprep.subr.mxu0 0.0
        %1355 = vmatpush2.msra.mxu0 0.0
        %1356 = vmatprep.subr.mxu0 0.0
        %1357 = vmatpush2.msra.mxu0 0.0
        %1358 = vmatprep.mubr.f32.mxu0 0.0
        %1359 = vmatmul.mubr.f32.gmra.mxu0 %v1286
        %v1360 = vpop.f32.mrf.mxu0
        %v1361 = vadd.f32 0.0, %v1360
        %v1362 = vpop.f32.mrf.mxu0
        %v1363 = vadd.f32 0.0, %v1362
        %1364 = vmatprep.mubr.f32.mxu0 0.0
        %1365 = vmatmul.mubr.f32.gmra.mxu0 %v1288
        %v1366 = vpop.f32.mrf.mxu0
        %v1367 = vadd.f32 0.0, %v1366
        %v1368 = vpop.f32.mrf.mxu0
        %v1369 = vadd.f32 0.0, %v1368
        %1370 = vmatprep.mubr.f32.mxu0 0.0
        %1371 = vmatmul.mubr.f32.gmra.mxu0 %v1290
        %v1372 = vpop.f32.mrf.mxu0
        %v1373 = vadd.f32 0.0, %v1372
        %v1374 = vpop.f32.mrf.mxu0
        %v1375 = vadd.f32 0.0, %v1374
        %1376 = vmatprep.mubr.f32.mxu0 0.0
        %1377 = vmatmul.mubr.f32.gmra.mxu0 %v1292
        %v1378 = vpop.f32.mrf.mxu0
        %v1379 = vadd.f32 0.0, %v1378
        %v1380 = vpop.f32.mrf.mxu0
        %v1381 = vadd.f32 0.0, %v1380
        %1382 = vdwg.mxu0
        %1383 = vmatprep.subr.mxu0 0.0
        %1384 = vmatpush1.msra.mxu0 0.0
        %1385 = vmatprep.subr.mxu0 0.0
        %1386 = vmatpush1.msra.mxu0 0.0
        %1387 = vmatprep.subr.mxu0 0.0
        %1388 = vmatpush1.msra.mxu0 0.0
        %1389 = vmatprep.subr.mxu0 0.0
        %1390 = vmatpush1.msra.mxu0 0.0
        %1391 = vmatprep.subr.mxu0 0.0
        %1392 = vmatpush1.msra.mxu0 0.0
        %1393 = vmatprep.subr.mxu0 0.0
        %1394 = vmatpush1.msra.mxu0 0.0
        %1395 = vmatprep.subr.mxu0 0.0
        %1396 = vmatpush1.msra.mxu0 0.0
        %1397 = vmatprep.subr.mxu0 0.0
        %1398 = vmatpush1.msra.mxu0 0.0
        %1399 = vmatprep.subr.mxu0 0.0
        %1400 = vmatpush1.msra.mxu0 0.0
        %1401 = vmatprep.subr.mxu0 0.0
        %1402 = vmatpush1.msra.mxu0 0.0
        %1403 = vmatprep.subr.mxu0 0.0
        %1404 = vmatpush1.msra.mxu0 0.0
        %1405 = vmatprep.subr.mxu0 0.0
        %1406 = vmatpush1.msra.mxu0 0.0
        %1407 = vmatprep.subr.mxu0 0.0
        %1408 = vmatpush1.msra.mxu0 0.0
        %1409 = vmatprep.subr.mxu0 0.0
        %1410 = vmatpush1.msra.mxu0 0.0
        %1411 = vmatprep.subr.mxu0 0.0
        %1412 = vmatpush1.msra.mxu0 0.0
        %1413 = vmatprep.subr.mxu0 %v331
        %1414 = vmatpush1.msra.mxu0 %v330
        %1415 = vmatprep.subr.mxu0 0.0
        %1416 = vmatpush2.msra.mxu0 0.0
        %1417 = vmatprep.subr.mxu0 0.0
        %1418 = vmatpush2.msra.mxu0 0.0
        %1419 = vmatprep.subr.mxu0 0.0
        %1420 = vmatpush2.msra.mxu0 0.0
        %1421 = vmatprep.subr.mxu0 0.0
        %1422 = vmatpush2.msra.mxu0 0.0
        %1423 = vmatprep.subr.mxu0 0.0
        %1424 = vmatpush2.msra.mxu0 0.0
        %1425 = vmatprep.subr.mxu0 0.0
        %1426 = vmatpush2.msra.mxu0 0.0
        %1427 = vmatprep.subr.mxu0 0.0
        %1428 = vmatpush2.msra.mxu0 0.0
        %1429 = vmatprep.subr.mxu0 0.0
        %1430 = vmatpush2.msra.mxu0 0.0
        %1431 = vmatprep.subr.mxu0 0.0
        %1432 = vmatpush2.msra.mxu0 0.0
        %1433 = vmatprep.subr.mxu0 0.0
        %1434 = vmatpush2.msra.mxu0 0.0
        %1435 = vmatprep.subr.mxu0 0.0
        %1436 = vmatpush2.msra.mxu0 0.0
        %1437 = vmatprep.subr.mxu0 0.0
        %1438 = vmatpush2.msra.mxu0 0.0
        %1439 = vmatprep.subr.mxu0 0.0
        %1440 = vmatpush2.msra.mxu0 0.0
        %1441 = vmatprep.subr.mxu0 0.0
        %1442 = vmatpush2.msra.mxu0 0.0
        %1443 = vmatprep.subr.mxu0 0.0
        %1444 = vmatpush2.msra.mxu0 0.0
        %1445 = vmatprep.subr.mxu0 0.0
        %1446 = vmatpush2.msra.mxu0 0.0
        %1447 = vmatprep.mubr.f32.mxu0 0.0
        %1448 = vmatmul.mubr.f32.gmra.mxu0 %v1286
        %v1449 = vpop.f32.mrf.mxu0
        %v1450 = vadd.f32 0.0, %v1449
        %v1451 = vpop.f32.mrf.mxu0
        %v1452 = vadd.f32 0.0, %v1451
        %1453 = vmatprep.mubr.f32.mxu0 0.0
        %1454 = vmatmul.mubr.f32.gmra.mxu0 %v1288
        %v1455 = vpop.f32.mrf.mxu0
        %v1456 = vadd.f32 0.0, %v1455
        %v1457 = vpop.f32.mrf.mxu0
        %v1458 = vadd.f32 0.0, %v1457
        %1459 = vmatprep.mubr.f32.mxu0 0.0
        %1460 = vmatmul.mubr.f32.gmra.mxu0 %v1290
        %v1461 = vpop.f32.mrf.mxu0
        %v1462 = vadd.f32 0.0, %v1461
        %v1463 = vpop.f32.mrf.mxu0
        %v1464 = vadd.f32 0.0, %v1463
        %1465 = vmatprep.mubr.f32.mxu0 0.0
        %1466 = vmatmul.mubr.f32.gmra.mxu0 %v1292
        %v1467 = vpop.f32.mrf.mxu0
        %v1468 = vadd.f32 0.0, %v1467
        %v1469 = vpop.f32.mrf.mxu0
        %v1470 = vadd.f32 0.0, %v1469
        %1471 = vdwg.mxu0
        %vm1472 = vcmask 236544
        %v1473 = vsel %vm1472, %v1270, 0
        %v1475 = vsel %vm1472, %v1271, 0
        %v1477 = vsel %vm1472, %v1272, 0
        %v1479 = vsel %vm1472, %v1273, 0
        %vm1481 = vcmask 1044480
        %v1483 = vsel %vm1481, %v1266, 0
        %v1486 = vsel %vm1481, %v1267, 0
        %v1489 = vsel %vm1481, %v1268, 0
        %v1492 = vsel %vm1481, %v1269, 0
        %1494 = vmatprep.subr.mxu0 0.0
        %1495 = vmatpush1.msra.mxu0 0.0
        %1496 = vmatprep.subr.mxu0 0.0
        %1497 = vmatpush1.msra.mxu0 0.0
        %1498 = vmatprep.subr.mxu0 0.0
        %1499 = vmatpush1.msra.mxu0 0.0
        %1500 = vmatprep.subr.mxu0 0.0
        %1501 = vmatpush1.msra.mxu0 0.0
        %1502 = vmatprep.subr.mxu0 0.0
        %1503 = vmatpush1.msra.mxu0 0.0
        %1504 = vmatprep.subr.mxu0 0.0
        %1505 = vmatpush1.msra.mxu0 0.0
        %1506 = vmatprep.subr.mxu0 0.0
        %1507 = vmatpush1.msra.mxu0 0.0
        %1508 = vmatprep.subr.mxu0 0.0
        %1509 = vmatpush1.msra.mxu0 0.0
        %1510 = vmatprep.subr.mxu0 0.0
        %1511 = vmatpush1.msra.mxu0 0.0
        %1512 = vmatprep.subr.mxu0 0.0
        %1513 = vmatpush1.msra.mxu0 0.0
        %1514 = vmatprep.subr.mxu0 0.0
        %1515 = vmatpush1.msra.mxu0 0.0
        %1516 = vmatprep.subr.mxu0 0.0
        %1517 = vmatpush1.msra.mxu0 0.0
        %1518 = vmatprep.subr.mxu0 %v1486
        %1519 = vmatpush1.msra.mxu0 %v1483
        %1520 = vmatprep.subr.mxu0 %v1263
        %1521 = vmatpush1.msra.mxu0 %v1262
        %1522 = vmatprep.subr.mxu0 %v1259
        %1523 = vmatpush1.msra.mxu0 %v1258
        %1524 = vmatprep.subr.mxu0 %v1255
        %1525 = vmatpush1.msra.mxu0 %v1254
        %1526 = vmatprep.subr.mxu0 0.0
        %1527 = vmatpush2.msra.mxu0 0.0
        %1528 = vmatprep.subr.mxu0 0.0
        %1529 = vmatpush2.msra.mxu0 0.0
        %1530 = vmatprep.subr.mxu0 0.0
        %1531 = vmatpush2.msra.mxu0 0.0
        %1532 = vmatprep.subr.mxu0 0.0
        %1533 = vmatpush2.msra.mxu0 0.0
        %1534 = vmatprep.subr.mxu0 0.0
        %1535 = vmatpush2.msra.mxu0 0.0
        %1536 = vmatprep.subr.mxu0 0.0
        %1537 = vmatpush2.msra.mxu0 0.0
        %1538 = vmatprep.subr.mxu0 0.0
        %1539 = vmatpush2.msra.mxu0 0.0
        %1540 = vmatprep.subr.mxu0 0.0
        %1541 = vmatpush2.msra.mxu0 0.0
        %1542 = vmatprep.subr.mxu0 0.0
        %1543 = vmatpush2.msra.mxu0 0.0
        %1544 = vmatprep.subr.mxu0 0.0
        %1545 = vmatpush2.msra.mxu0 0.0
        %1546 = vmatprep.subr.mxu0 0.0
        %1547 = vmatpush2.msra.mxu0 0.0
        %1548 = vmatprep.subr.mxu0 0.0
        %1549 = vmatpush2.msra.mxu0 0.0
        %1550 = vmatprep.subr.mxu0 0.0
        %1551 = vmatpush2.msra.mxu0 0.0
        %1552 = vmatprep.subr.mxu0 0.0
        %1553 = vmatpush2.msra.mxu0 0.0
        %1554 = vmatprep.subr.mxu0 0.0
        %1555 = vmatpush2.msra.mxu0 0.0
        %1556 = vmatprep.subr.mxu0 0.0
        %1557 = vmatpush2.msra.mxu0 0.0
        %1558 = vmatprep.mubr.f32.mxu0 0.0
        %1559 = vmatmul.mubr.f32.gmra.mxu0 %v1473
        %v1560 = vpop.f32.mrf.mxu0
        %v1561 = vadd.f32 %v1361, %v1560
        %v1562 = vpop.f32.mrf.mxu0
        %v1563 = vadd.f32 %v1363, %v1562
        %1564 = vmatprep.mubr.f32.mxu0 0.0
        %1565 = vmatmul.mubr.f32.gmra.mxu0 %v1475
        %v1566 = vpop.f32.mrf.mxu0
        %v1567 = vadd.f32 %v1367, %v1566
        %v1568 = vpop.f32.mrf.mxu0
        %v1569 = vadd.f32 %v1369, %v1568
        %1570 = vmatprep.mubr.f32.mxu0 0.0
        %1571 = vmatmul.mubr.f32.gmra.mxu0 %v1477
        %v1572 = vpop.f32.mrf.mxu0
        %v1573 = vadd.f32 %v1373, %v1572
        %v1574 = vpop.f32.mrf.mxu0
        %v1575 = vadd.f32 %v1375, %v1574
        %1576 = vmatprep.mubr.f32.mxu0 0.0
        %1577 = vmatmul.mubr.f32.gmra.mxu0 %v1479
        %v1578 = vpop.f32.mrf.mxu0
        %v1579 = vadd.f32 %v1379, %v1578
        %v1580 = vpop.f32.mrf.mxu0
        %v1581 = vadd.f32 %v1381, %v1580
        %1582 = vdwg.mxu0
        %1583 = vmatprep.subr.mxu0 0.0
        %1584 = vmatpush1.msra.mxu0 0.0
        %1585 = vmatprep.subr.mxu0 0.0
        %1586 = vmatpush1.msra.mxu0 0.0
        %1587 = vmatprep.subr.mxu0 0.0
        %1588 = vmatpush1.msra.mxu0 0.0
        %1589 = vmatprep.subr.mxu0 0.0
        %1590 = vmatpush1.msra.mxu0 0.0
        %1591 = vmatprep.subr.mxu0 0.0
        %1592 = vmatpush1.msra.mxu0 0.0
        %1593 = vmatprep.subr.mxu0 0.0
        %1594 = vmatpush1.msra.mxu0 0.0
        %1595 = vmatprep.subr.mxu0 0.0
        %1596 = vmatpush1.msra.mxu0 0.0
        %1597 = vmatprep.subr.mxu0 0.0
        %1598 = vmatpush1.msra.mxu0 0.0
        %1599 = vmatprep.subr.mxu0 0.0
        %1600 = vmatpush1.msra.mxu0 0.0
        %1601 = vmatprep.subr.mxu0 0.0
        %1602 = vmatpush1.msra.mxu0 0.0
        %1603 = vmatprep.subr.mxu0 0.0
        %1604 = vmatpush1.msra.mxu0 0.0
        %1605 = vmatprep.subr.mxu0 0.0
        %1606 = vmatpush1.msra.mxu0 0.0
        %1607 = vmatprep.subr.mxu0 %v1492
        %1608 = vmatpush1.msra.mxu0 %v1489
        %1609 = vmatprep.subr.mxu0 %v1265
        %1610 = vmatpush1.msra.mxu0 %v1264
        %1611 = vmatprep.subr.mxu0 %v1261
        %1612 = vmatpush1.msra.mxu0 %v1260
        %1613 = vmatprep.subr.mxu0 %v1257
        %1614 = vmatpush1.msra.mxu0 %v1256
        %1615 = vmatprep.subr.mxu0 0.0
        %1616 = vmatpush2.msra.mxu0 0.0
        %1617 = vmatprep.subr.mxu0 0.0
        %1618 = vmatpush2.msra.mxu0 0.0
        %1619 = vmatprep.subr.mxu0 0.0
        %1620 = vmatpush2.msra.mxu0 0.0
        %1621 = vmatprep.subr.mxu0 0.0
        %1622 = vmatpush2.msra.mxu0 0.0
        %1623 = vmatprep.subr.mxu0 0.0
        %1624 = vmatpush2.msra.mxu0 0.0
        %1625 = vmatprep.subr.mxu0 0.0
        %1626 = vmatpush2.msra.mxu0 0.0
        %1627 = vmatprep.subr.mxu0 0.0
        %1628 = vmatpush2.msra.mxu0 0.0
        %1629 = vmatprep.subr.mxu0 0.0
        %1630 = vmatpush2.msra.mxu0 0.0
        %1631 = vmatprep.subr.mxu0 0.0
        %1632 = vmatpush2.msra.mxu0 0.0
        %1633 = vmatprep.subr.mxu0 0.0
        %1634 = vmatpush2.msra.mxu0 0.0
        %1635 = vmatprep.subr.mxu0 0.0
        %1636 = vmatpush2.msra.mxu0 0.0
        %1637 = vmatprep.subr.mxu0 0.0
        %1638 = vmatpush2.msra.mxu0 0.0
        %1639 = vmatprep.subr.mxu0 0.0
        %1640 = vmatpush2.msra.mxu0 0.0
        %1641 = vmatprep.subr.mxu0 0.0
        %1642 = vmatpush2.msra.mxu0 0.0
        %1643 = vmatprep.subr.mxu0 0.0
        %1644 = vmatpush2.msra.mxu0 0.0
        %1645 = vmatprep.subr.mxu0 0.0
        %1646 = vmatpush2.msra.mxu0 0.0
        %1647 = vmatprep.mubr.f32.mxu0 0.0
        %1648 = vmatmul.mubr.f32.gmra.mxu0 %v1473
        %v1649 = vpop.f32.mrf.mxu0
        %v1650 = vadd.f32 %v1450, %v1649
        %v1651 = vpop.f32.mrf.mxu0
        %v1652 = vadd.f32 %v1452, %v1651
        %1653 = vmatprep.mubr.f32.mxu0 0.0
        %1654 = vmatmul.mubr.f32.gmra.mxu0 %v1475
        %v1655 = vpop.f32.mrf.mxu0
        %v1656 = vadd.f32 %v1456, %v1655
        %v1657 = vpop.f32.mrf.mxu0
        %v1658 = vadd.f32 %v1458, %v1657
        %1659 = vmatprep.mubr.f32.mxu0 0.0
        %1660 = vmatmul.mubr.f32.gmra.mxu0 %v1477
        %v1661 = vpop.f32.mrf.mxu0
        %v1662 = vadd.f32 %v1462, %v1661
        %v1663 = vpop.f32.mrf.mxu0
        %v1664 = vadd.f32 %v1464, %v1663
        %1665 = vmatprep.mubr.f32.mxu0 0.0
        %1666 = vmatmul.mubr.f32.gmra.mxu0 %v1479
        %v1667 = vpop.f32.mrf.mxu0
        %v1668 = vadd.f32 %v1468, %v1667
        %v1669 = vpop.f32.mrf.mxu0
        %v1670 = vadd.f32 %v1470, %v1669
        %1671 = vdwg.mxu0
        %v1672 = vmul.f32 %v1561, 0.70710677
        %v1673 = vmul.f32 %v1563, 0.70710677
        %v1674 = vmul.f32 %v1650, 0.70710677
        %v1675 = vmul.f32 %v1652, 0.70710677
        %v1676 = vmul.f32 %v1567, 0.70710677
        %v1677 = vmul.f32 %v1569, 0.70710677
        %v1678 = vmul.f32 %v1656, 0.70710677
        %v1679 = vmul.f32 %v1658, 0.70710677
        %v1680 = vmul.f32 %v1573, 0.70710677
        %v1681 = vmul.f32 %v1575, 0.70710677
        %v1682 = vmul.f32 %v1662, 0.70710677
        %v1683 = vmul.f32 %v1664, 0.70710677
        %v1684 = vmul.f32 %v1579, 0.70710677
        %v1685 = vmul.f32 %v1581, 0.70710677
        %v1686 = vmul.f32 %v1668, 0.70710677
        %v1687 = vmul.f32 %v1670, 0.70710677
        %1688 = vset.pattern.permute.xlu0 2
        %1689 = vperm.xlu0 %1688, %v324
        %v1690 = vpop.permute.xlu0 %1689
        %1692 = vset.pattern.permute.xlu0 2
        %1693 = vperm.xlu0 %1692, %v325
        %v1694 = vpop.permute.xlu0 %1693
        %1696 = vset.pattern.permute.xlu0 2
        %1697 = vperm.xlu0 %1696, %v326
        %v1698 = vpop.permute.xlu0 %1697
        %1700 = vset.pattern.permute.xlu0 2
        %1701 = vperm.xlu0 %1700, %v327
        %v1702 = vpop.permute.xlu0 %1701
        %v1704 = vadd.f32 %v1672, %v1690
        %v1705 = vadd.f32 %v1673, %v1690
        %v1706 = vadd.f32 %v1674, %v1690
        %v1707 = vadd.f32 %v1675, %v1690
        %v1708 = vadd.f32 %v1676, %v1694
        %v1709 = vadd.f32 %v1677, %v1694
        %v1710 = vadd.f32 %v1678, %v1694
        %v1711 = vadd.f32 %v1679, %v1694
        %v1712 = vadd.f32 %v1680, %v1698
        %v1713 = vadd.f32 %v1681, %v1698
        %v1714 = vadd.f32 %v1682, %v1698
        %v1715 = vadd.f32 %v1683, %v1698
        %v1716 = vadd.f32 %v1684, %v1702
        %v1717 = vadd.f32 %v1685, %v1702
        %v1718 = vadd.f32 %v1686, %v1702
        %v1719 = vadd.f32 %v1687, %v1702
        %v1720 = vmul.f32 %v1704, 100.0
        %v1721 = vmul.f32 %v1705, 100.0
        %v1722 = vmul.f32 %v1706, 100.0
        %v1723 = vmul.f32 %v1707, 100.0
        %v1724 = vmul.f32 %v1708, 100.0
        %v1725 = vmul.f32 %v1709, 100.0
        %v1726 = vmul.f32 %v1710, 100.0
        %v1727 = vmul.f32 %v1711, 100.0
        %v1728 = vmul.f32 %v1712, 100.0
        %v1729 = vmul.f32 %v1713, 100.0
        %v1730 = vmul.f32 %v1714, 100.0
        %v1731 = vmul.f32 %v1715, 100.0
        %v1732 = vmul.f32 %v1716, 100.0
        %v1733 = vmul.f32 %v1717, 100.0
        %v1734 = vmul.f32 %v1718, 100.0
        %v1735 = vmul.f32 %v1719, 100.0
        %v1736 = vmin.f32 %v1720, 20.0
        %v1737 = vmin.f32 %v1721, 20.0
        %v1738 = vmin.f32 %v1722, 20.0
        %v1739 = vmin.f32 %v1723, 20.0
        %v1740 = vmin.f32 %v1724, 20.0
        %v1741 = vmin.f32 %v1725, 20.0
        %v1742 = vmin.f32 %v1726, 20.0
        %v1743 = vmin.f32 %v1727, 20.0
        %v1744 = vmin.f32 %v1728, 20.0
        %v1745 = vmin.f32 %v1729, 20.0
        %v1746 = vmin.f32 %v1730, 20.0
        %v1747 = vmin.f32 %v1731, 20.0
        %v1748 = vmin.f32 %v1732, 20.0
        %v1749 = vmin.f32 %v1733, 20.0
        %v1750 = vmin.f32 %v1734, 20.0
        %v1751 = vmin.f32 %v1735, 20.0
        %v1752 = vmul.f32 %v1736, 1.442695
        %v1753 = vpow.pop %v1752
        %v1754 = vmul.f32 %v1737, 1.442695
        %v1755 = vpow.pop %v1754
        %v1756 = vmul.f32 %v1738, 1.442695
        %v1757 = vpow.pop %v1756
        %v1758 = vmul.f32 %v1739, 1.442695
        %v1759 = vpow.pop %v1758
        %v1760 = vmul.f32 %v1740, 1.442695
        %v1761 = vpow.pop %v1760
        %v1762 = vmul.f32 %v1741, 1.442695
        %v1763 = vpow.pop %v1762
        %v1764 = vmul.f32 %v1742, 1.442695
        %v1765 = vpow.pop %v1764
        %v1766 = vmul.f32 %v1743, 1.442695
        %v1767 = vpow.pop %v1766
        %v1768 = vmul.f32 %v1744, 1.442695
        %v1769 = vpow.pop %v1768
        %v1770 = vmul.f32 %v1745, 1.442695
        %v1771 = vpow.pop %v1770
        %v1772 = vmul.f32 %v1746, 1.442695
        %v1773 = vpow.pop %v1772
        %v1774 = vmul.f32 %v1747, 1.442695
        %v1775 = vpow.pop %v1774
        %v1776 = vmul.f32 %v1748, 1.442695
        %v1777 = vpow.pop %v1776
        %v1778 = vmul.f32 %v1749, 1.442695
        %v1779 = vpow.pop %v1778
        %v1780 = vmul.f32 %v1750, 1.442695
        %v1781 = vpow.pop %v1780
        %v1782 = vmul.f32 %v1751, 1.442695
        %v1783 = vpow.pop %v1782
        %v1784 = vadd.f32 %v1753, 1.0
        %v1785 = vlog2.pop %v1784
        %v1786 = vmul.f32 %v1785, 0.6931472
        %v1787 = vmul.f32 -0.5, %v1753
        %v1788 = vadd.f32 %v1787, 1.0
        %v1789 = vmul.f32 %v1788, %v1753
        %v1790 = vand.u32 2147483647, %v1753
        %vm1791 = vcmp.lt.f32.partialorder %v1790, 0.0004427343
        %v1792 = vsel %vm1791, %v1789, %v1786
        %v1793 = vadd.f32 %v1755, 1.0
        %v1794 = vlog2.pop %v1793
        %v1795 = vmul.f32 %v1794, 0.6931472
        %v1796 = vmul.f32 -0.5, %v1755
        %v1797 = vadd.f32 %v1796, 1.0
        %v1798 = vmul.f32 %v1797, %v1755
        %v1799 = vand.u32 2147483647, %v1755
        %vm1800 = vcmp.lt.f32.partialorder %v1799, 0.0004427343
        %v1801 = vsel %vm1800, %v1798, %v1795
        %v1802 = vadd.f32 %v1757, 1.0
        %v1803 = vlog2.pop %v1802
        %v1804 = vmul.f32 %v1803, 0.6931472
        %v1805 = vmul.f32 -0.5, %v1757
        %v1806 = vadd.f32 %v1805, 1.0
        %v1807 = vmul.f32 %v1806, %v1757
        %v1808 = vand.u32 2147483647, %v1757
        %vm1809 = vcmp.lt.f32.partialorder %v1808, 0.0004427343
        %v1810 = vsel %vm1809, %v1807, %v1804
        %v1811 = vadd.f32 %v1759, 1.0
        %v1812 = vlog2.pop %v1811
        %v1813 = vmul.f32 %v1812, 0.6931472
        %v1814 = vmul.f32 -0.5, %v1759
        %v1815 = vadd.f32 %v1814, 1.0
        %v1816 = vmul.f32 %v1815, %v1759
        %v1817 = vand.u32 2147483647, %v1759
        %vm1818 = vcmp.lt.f32.partialorder %v1817, 0.0004427343
        %v1819 = vsel %vm1818, %v1816, %v1813
        %v1820 = vadd.f32 %v1761, 1.0
        %v1821 = vlog2.pop %v1820
        %v1822 = vmul.f32 %v1821, 0.6931472
        %v1823 = vmul.f32 -0.5, %v1761
        %v1824 = vadd.f32 %v1823, 1.0
        %v1825 = vmul.f32 %v1824, %v1761
        %v1826 = vand.u32 2147483647, %v1761
        %vm1827 = vcmp.lt.f32.partialorder %v1826, 0.0004427343
        %v1828 = vsel %vm1827, %v1825, %v1822
        %v1829 = vadd.f32 %v1763, 1.0
        %v1830 = vlog2.pop %v1829
        %v1831 = vmul.f32 %v1830, 0.6931472
        %v1832 = vmul.f32 -0.5, %v1763
        %v1833 = vadd.f32 %v1832, 1.0
        %v1834 = vmul.f32 %v1833, %v1763
        %v1835 = vand.u32 2147483647, %v1763
        %vm1836 = vcmp.lt.f32.partialorder %v1835, 0.0004427343
        %v1837 = vsel %vm1836, %v1834, %v1831
        %v1838 = vadd.f32 %v1765, 1.0
        %v1839 = vlog2.pop %v1838
        %v1840 = vmul.f32 %v1839, 0.6931472
        %v1841 = vmul.f32 -0.5, %v1765
        %v1842 = vadd.f32 %v1841, 1.0
        %v1843 = vmul.f32 %v1842, %v1765
        %v1844 = vand.u32 2147483647, %v1765
        %vm1845 = vcmp.lt.f32.partialorder %v1844, 0.0004427343
        %v1846 = vsel %vm1845, %v1843, %v1840
        %v1847 = vadd.f32 %v1767, 1.0
        %v1848 = vlog2.pop %v1847
        %v1849 = vmul.f32 %v1848, 0.6931472
        %v1850 = vmul.f32 -0.5, %v1767
        %v1851 = vadd.f32 %v1850, 1.0
        %v1852 = vmul.f32 %v1851, %v1767
        %v1853 = vand.u32 2147483647, %v1767
        %vm1854 = vcmp.lt.f32.partialorder %v1853, 0.0004427343
        %v1855 = vsel %vm1854, %v1852, %v1849
        %v1856 = vadd.f32 %v1769, 1.0
        %v1857 = vlog2.pop %v1856
        %v1858 = vmul.f32 %v1857, 0.6931472
        %v1859 = vmul.f32 -0.5, %v1769
        %v1860 = vadd.f32 %v1859, 1.0
        %v1861 = vmul.f32 %v1860, %v1769
        %v1862 = vand.u32 2147483647, %v1769
        %vm1863 = vcmp.lt.f32.partialorder %v1862, 0.0004427343
        %v1864 = vsel %vm1863, %v1861, %v1858
        %v1865 = vadd.f32 %v1771, 1.0
        %v1866 = vlog2.pop %v1865
        %v1867 = vmul.f32 %v1866, 0.6931472
        %v1868 = vmul.f32 -0.5, %v1771
        %v1869 = vadd.f32 %v1868, 1.0
        %v1870 = vmul.f32 %v1869, %v1771
        %v1871 = vand.u32 2147483647, %v1771
        %vm1872 = vcmp.lt.f32.partialorder %v1871, 0.0004427343
        %v1873 = vsel %vm1872, %v1870, %v1867
        %v1874 = vadd.f32 %v1773, 1.0
        %v1875 = vlog2.pop %v1874
        %v1876 = vmul.f32 %v1875, 0.6931472
        %v1877 = vmul.f32 -0.5, %v1773
        %v1878 = vadd.f32 %v1877, 1.0
        %v1879 = vmul.f32 %v1878, %v1773
        %v1880 = vand.u32 2147483647, %v1773
        %vm1881 = vcmp.lt.f32.partialorder %v1880, 0.0004427343
        %v1882 = vsel %vm1881, %v1879, %v1876
        %v1883 = vadd.f32 %v1775, 1.0
        %v1884 = vlog2.pop %v1883
        %v1885 = vmul.f32 %v1884, 0.6931472
        %v1886 = vmul.f32 -0.5, %v1775
        %v1887 = vadd.f32 %v1886, 1.0
        %v1888 = vmul.f32 %v1887, %v1775
        %v1889 = vand.u32 2147483647, %v1775
        %vm1890 = vcmp.lt.f32.partialorder %v1889, 0.0004427343
        %v1891 = vsel %vm1890, %v1888, %v1885
        %v1892 = vadd.f32 %v1777, 1.0
        %v1893 = vlog2.pop %v1892
        %v1894 = vmul.f32 %v1893, 0.6931472
        %v1895 = vmul.f32 -0.5, %v1777
        %v1896 = vadd.f32 %v1895, 1.0
        %v1897 = vmul.f32 %v1896, %v1777
        %v1898 = vand.u32 2147483647, %v1777
        %vm1899 = vcmp.lt.f32.partialorder %v1898, 0.0004427343
        %v1900 = vsel %vm1899, %v1897, %v1894
        %v1901 = vadd.f32 %v1779, 1.0
        %v1902 = vlog2.pop %v1901
        %v1903 = vmul.f32 %v1902, 0.6931472
        %v1904 = vmul.f32 -0.5, %v1779
        %v1905 = vadd.f32 %v1904, 1.0
        %v1906 = vmul.f32 %v1905, %v1779
        %v1907 = vand.u32 2147483647, %v1779
        %vm1908 = vcmp.lt.f32.partialorder %v1907, 0.0004427343
        %v1909 = vsel %vm1908, %v1906, %v1903
        %v1910 = vadd.f32 %v1781, 1.0
        %v1911 = vlog2.pop %v1910
        %v1912 = vmul.f32 %v1911, 0.6931472
        %v1913 = vmul.f32 -0.5, %v1781
        %v1914 = vadd.f32 %v1913, 1.0
        %v1915 = vmul.f32 %v1914, %v1781
        %v1916 = vand.u32 2147483647, %v1781
        %vm1917 = vcmp.lt.f32.partialorder %v1916, 0.0004427343
        %v1918 = vsel %vm1917, %v1915, %v1912
        %v1919 = vadd.f32 %v1783, 1.0
        %v1920 = vlog2.pop %v1919
        %v1921 = vmul.f32 %v1920, 0.6931472
        %v1922 = vmul.f32 -0.5, %v1783
        %v1923 = vadd.f32 %v1922, 1.0
        %v1924 = vmul.f32 %v1923, %v1783
        %v1925 = vand.u32 2147483647, %v1783
        %vm1926 = vcmp.lt.f32.partialorder %v1925, 0.0004427343
        %v1927 = vsel %vm1926, %v1924, %v1921
        %v1928 = vmul.f32 %v1792, 0.01
        %v1929 = vmul.f32 %v1801, 0.01
        %v1930 = vmul.f32 %v1810, 0.01
        %v1931 = vmul.f32 %v1819, 0.01
        %v1932 = vmul.f32 %v1828, 0.01
        %v1933 = vmul.f32 %v1837, 0.01
        %v1934 = vmul.f32 %v1846, 0.01
        %v1935 = vmul.f32 %v1855, 0.01
        %v1936 = vmul.f32 %v1864, 0.01
        %v1937 = vmul.f32 %v1873, 0.01
        %v1938 = vmul.f32 %v1882, 0.01
        %v1939 = vmul.f32 %v1891, 0.01
        %v1940 = vmul.f32 %v1900, 0.01
        %v1941 = vmul.f32 %v1909, 0.01
        %v1942 = vmul.f32 %v1918, 0.01
        %v1943 = vmul.f32 %v1927, 0.01
        %vm1944 = vcmp.gt.f32.partialorder %v1720, 20.0
        %vm1945 = vcmp.gt.f32.partialorder %v1721, 20.0
        %vm1946 = vcmp.gt.f32.partialorder %v1722, 20.0
        %vm1947 = vcmp.gt.f32.partialorder %v1723, 20.0
        %vm1948 = vcmp.gt.f32.partialorder %v1724, 20.0
        %vm1949 = vcmp.gt.f32.partialorder %v1725, 20.0
        %vm1950 = vcmp.gt.f32.partialorder %v1726, 20.0
        %vm1951 = vcmp.gt.f32.partialorder %v1727, 20.0
        %vm1952 = vcmp.gt.f32.partialorder %v1728, 20.0
        %vm1953 = vcmp.gt.f32.partialorder %v1729, 20.0
        %vm1954 = vcmp.gt.f32.partialorder %v1730, 20.0
        %vm1955 = vcmp.gt.f32.partialorder %v1731, 20.0
        %vm1956 = vcmp.gt.f32.partialorder %v1732, 20.0
        %vm1957 = vcmp.gt.f32.partialorder %v1733, 20.0
        %vm1958 = vcmp.gt.f32.partialorder %v1734, 20.0
        %vm1959 = vcmp.gt.f32.partialorder %v1735, 20.0
        %v1960 = vsel %vm1944, %v1704, %v1928
        %v1961 = vsel %vm1945, %v1705, %v1929
        %v1962 = vsel %vm1946, %v1706, %v1930
        %v1963 = vsel %vm1947, %v1707, %v1931
        %v1964 = vsel %vm1948, %v1708, %v1932
        %v1965 = vsel %vm1949, %v1709, %v1933
        %v1966 = vsel %vm1950, %v1710, %v1934
        %v1967 = vsel %vm1951, %v1711, %v1935
        %v1968 = vsel %vm1952, %v1712, %v1936
        %v1969 = vsel %vm1953, %v1713, %v1937
        %v1970 = vsel %vm1954, %v1714, %v1938
        %v1971 = vsel %vm1955, %v1715, %v1939
        %v1972 = vsel %vm1956, %v1716, %v1940
        %v1973 = vsel %vm1957, %v1717, %v1941
        %v1974 = vsel %vm1958, %v1718, %v1942
        %v1975 = vsel %vm1959, %v1719, %v1943
        %v1976 = vld [vmem:[#allocation7] sm:$0xff]
        %v1977 = vld [vmem:[#allocation7 + $0x8] sm:$0xff]
        %v1978 = vld [vmem:[#allocation7 + $0x10] sm:$0xff]
        %v1979 = vld [vmem:[#allocation7 + $0x18] sm:$0xff]
        %1980 = vset.pattern.permute.xlu0 3
        %1981 = vperm.xlu0 %1980, %v324
        %v1982 = vpop.permute.xlu0 %1981
        %1984 = vset.pattern.permute.xlu0 3
        %1985 = vperm.xlu0 %1984, %v325
        %v1986 = vpop.permute.xlu0 %1985
        %1988 = vset.pattern.permute.xlu0 3
        %1989 = vperm.xlu0 %1988, %v326
        %v1990 = vpop.permute.xlu0 %1989
        %1992 = vset.pattern.permute.xlu0 3
        %1993 = vperm.xlu0 %1992, %v327
        %v1994 = vpop.permute.xlu0 %1993
        %v1997 = vsel %vm823, %v1976, 0
        %v2000 = vsel %vm823, %v1977, 0
        %v2003 = vsel %vm823, %v1978, 0
        %v2006 = vsel %vm823, %v1979, 0
        %2008 = vmatprep.subr.mxu0 0.0
        %2009 = vmatpush1.msra.mxu0 0.0
        %2010 = vmatprep.subr.mxu0 0.0
        %2011 = vmatpush1.msra.mxu0 0.0
        %2012 = vmatprep.subr.mxu0 0.0
        %2013 = vmatpush1.msra.mxu0 0.0
        %2014 = vmatprep.subr.mxu0 0.0
        %2015 = vmatpush1.msra.mxu0 0.0
        %2016 = vmatprep.subr.mxu0 0.0
        %2017 = vmatpush1.msra.mxu0 0.0
        %2018 = vmatprep.subr.mxu0 0.0
        %2019 = vmatpush1.msra.mxu0 0.0
        %2020 = vmatprep.subr.mxu0 0.0
        %2021 = vmatpush1.msra.mxu0 0.0
        %2022 = vmatprep.subr.mxu0 0.0
        %2023 = vmatpush1.msra.mxu0 0.0
        %2024 = vmatprep.subr.mxu0 0.0
        %2025 = vmatpush1.msra.mxu0 0.0
        %2026 = vmatprep.subr.mxu0 0.0
        %2027 = vmatpush1.msra.mxu0 0.0
        %2028 = vmatprep.subr.mxu0 0.0
        %2029 = vmatpush1.msra.mxu0 0.0
        %2030 = vmatprep.subr.mxu0 0.0
        %2031 = vmatpush1.msra.mxu0 0.0
        %2032 = vmatprep.subr.mxu0 %v1973
        %2033 = vmatpush1.msra.mxu0 %v1972
        %2034 = vmatprep.subr.mxu0 %v1969
        %2035 = vmatpush1.msra.mxu0 %v1968
        %2036 = vmatprep.subr.mxu0 %v1965
        %2037 = vmatpush1.msra.mxu0 %v1964
        %2038 = vmatprep.subr.mxu0 %v1961
        %2039 = vmatpush1.msra.mxu0 %v1960
        %2040 = vmatprep.subr.mxu0 0.0
        %2041 = vmatpush2.msra.mxu0 0.0
        %2042 = vmatprep.subr.mxu0 0.0
        %2043 = vmatpush2.msra.mxu0 0.0
        %2044 = vmatprep.subr.mxu0 0.0
        %2045 = vmatpush2.msra.mxu0 0.0
        %2046 = vmatprep.subr.mxu0 0.0
        %2047 = vmatpush2.msra.mxu0 0.0
        %2048 = vmatprep.subr.mxu0 0.0
        %2049 = vmatpush2.msra.mxu0 0.0
        %2050 = vmatprep.subr.mxu0 0.0
        %2051 = vmatpush2.msra.mxu0 0.0
        %2052 = vmatprep.subr.mxu0 0.0
        %2053 = vmatpush2.msra.mxu0 0.0
        %2054 = vmatprep.subr.mxu0 0.0
        %2055 = vmatpush2.msra.mxu0 0.0
        %2056 = vmatprep.subr.mxu0 0.0
        %2057 = vmatpush2.msra.mxu0 0.0
        %2058 = vmatprep.subr.mxu0 0.0
        %2059 = vmatpush2.msra.mxu0 0.0
        %2060 = vmatprep.subr.mxu0 0.0
        %2061 = vmatpush2.msra.mxu0 0.0
        %2062 = vmatprep.subr.mxu0 0.0
        %2063 = vmatpush2.msra.mxu0 0.0
        %2064 = vmatprep.subr.mxu0 0.0
        %2065 = vmatpush2.msra.mxu0 0.0
        %2066 = vmatprep.subr.mxu0 0.0
        %2067 = vmatpush2.msra.mxu0 0.0
        %2068 = vmatprep.subr.mxu0 0.0
        %2069 = vmatpush2.msra.mxu0 0.0
        %2070 = vmatprep.subr.mxu0 0.0
        %2071 = vmatpush2.msra.mxu0 0.0
        %2072 = vmatprep.mubr.f32.mxu0 0.0
        %2073 = vmatmul.mubr.f32.gmra.mxu0 %v1997
        %v2074 = vpop.f32.mrf.mxu0
        %v2075 = vadd.f32 %v1982, %v2074
        %v2076 = vpop.f32.mrf.mxu0
        %v2077 = vadd.f32 %v1982, %v2076
        %2078 = vmatprep.mubr.f32.mxu0 0.0
        %2079 = vmatmul.mubr.f32.gmra.mxu0 %v2000
        %v2080 = vpop.f32.mrf.mxu0
        %v2081 = vadd.f32 %v1986, %v2080
        %v2082 = vpop.f32.mrf.mxu0
        %v2083 = vadd.f32 %v1986, %v2082
        %2084 = vmatprep.mubr.f32.mxu0 0.0
        %2085 = vmatmul.mubr.f32.gmra.mxu0 %v2003
        %v2086 = vpop.f32.mrf.mxu0
        %v2087 = vadd.f32 %v1990, %v2086
        %v2088 = vpop.f32.mrf.mxu0
        %v2089 = vadd.f32 %v1990, %v2088
        %2090 = vmatprep.mubr.f32.mxu0 0.0
        %2091 = vmatmul.mubr.f32.gmra.mxu0 %v2006
        %v2092 = vpop.f32.mrf.mxu0
        %v2093 = vadd.f32 %v1994, %v2092
        %v2094 = vpop.f32.mrf.mxu0
        %v2095 = vadd.f32 %v1994, %v2094
        %2096 = vdwg.mxu0
        %2097 = vmatprep.subr.mxu0 0.0
        %2098 = vmatpush1.msra.mxu0 0.0
        %2099 = vmatprep.subr.mxu0 0.0
        %2100 = vmatpush1.msra.mxu0 0.0
        %2101 = vmatprep.subr.mxu0 0.0
        %2102 = vmatpush1.msra.mxu0 0.0
        %2103 = vmatprep.subr.mxu0 0.0
        %2104 = vmatpush1.msra.mxu0 0.0
        %2105 = vmatprep.subr.mxu0 0.0
        %2106 = vmatpush1.msra.mxu0 0.0
        %2107 = vmatprep.subr.mxu0 0.0
        %2108 = vmatpush1.msra.mxu0 0.0
        %2109 = vmatprep.subr.mxu0 0.0
        %2110 = vmatpush1.msra.mxu0 0.0
        %2111 = vmatprep.subr.mxu0 0.0
        %2112 = vmatpush1.msra.mxu0 0.0
        %2113 = vmatprep.subr.mxu0 0.0
        %2114 = vmatpush1.msra.mxu0 0.0
        %2115 = vmatprep.subr.mxu0 0.0
        %2116 = vmatpush1.msra.mxu0 0.0
        %2117 = vmatprep.subr.mxu0 0.0
        %2118 = vmatpush1.msra.mxu0 0.0
        %2119 = vmatprep.subr.mxu0 0.0
        %2120 = vmatpush1.msra.mxu0 0.0
        %2121 = vmatprep.subr.mxu0 %v1975
        %2122 = vmatpush1.msra.mxu0 %v1974
        %2123 = vmatprep.subr.mxu0 %v1971
        %2124 = vmatpush1.msra.mxu0 %v1970
        %2125 = vmatprep.subr.mxu0 %v1967
        %2126 = vmatpush1.msra.mxu0 %v1966
        %2127 = vmatprep.subr.mxu0 %v1963
        %2128 = vmatpush1.msra.mxu0 %v1962
        %2129 = vmatprep.subr.mxu0 0.0
        %2130 = vmatpush2.msra.mxu0 0.0
        %2131 = vmatprep.subr.mxu0 0.0
        %2132 = vmatpush2.msra.mxu0 0.0
        %2133 = vmatprep.subr.mxu0 0.0
        %2134 = vmatpush2.msra.mxu0 0.0
        %2135 = vmatprep.subr.mxu0 0.0
        %2136 = vmatpush2.msra.mxu0 0.0
        %2137 = vmatprep.subr.mxu0 0.0
        %2138 = vmatpush2.msra.mxu0 0.0
        %2139 = vmatprep.subr.mxu0 0.0
        %2140 = vmatpush2.msra.mxu0 0.0
        %2141 = vmatprep.subr.mxu0 0.0
        %2142 = vmatpush2.msra.mxu0 0.0
        %2143 = vmatprep.subr.mxu0 0.0
        %2144 = vmatpush2.msra.mxu0 0.0
        %2145 = vmatprep.subr.mxu0 0.0
        %2146 = vmatpush2.msra.mxu0 0.0
        %2147 = vmatprep.subr.mxu0 0.0
        %2148 = vmatpush2.msra.mxu0 0.0
        %2149 = vmatprep.subr.mxu0 0.0
        %2150 = vmatpush2.msra.mxu0 0.0
        %2151 = vmatprep.subr.mxu0 0.0
        %2152 = vmatpush2.msra.mxu0 0.0
        %2153 = vmatprep.subr.mxu0 0.0
        %2154 = vmatpush2.msra.mxu0 0.0
        %2155 = vmatprep.subr.mxu0 0.0
        %2156 = vmatpush2.msra.mxu0 0.0
        %2157 = vmatprep.subr.mxu0 0.0
        %2158 = vmatpush2.msra.mxu0 0.0
        %2159 = vmatprep.subr.mxu0 0.0
        %2160 = vmatpush2.msra.mxu0 0.0
        %2161 = vmatprep.mubr.f32.mxu0 0.0
        %2162 = vmatmul.mubr.f32.gmra.mxu0 %v1997
        %v2163 = vpop.f32.mrf.mxu0
        %v2164 = vadd.f32 %v1982, %v2163
        %v2165 = vpop.f32.mrf.mxu0
        %v2166 = vadd.f32 %v1982, %v2165
        %2167 = vmatprep.mubr.f32.mxu0 0.0
        %2168 = vmatmul.mubr.f32.gmra.mxu0 %v2000
        %v2169 = vpop.f32.mrf.mxu0
        %v2170 = vadd.f32 %v1986, %v2169
        %v2171 = vpop.f32.mrf.mxu0
        %v2172 = vadd.f32 %v1986, %v2171
        %2173 = vmatprep.mubr.f32.mxu0 0.0
        %2174 = vmatmul.mubr.f32.gmra.mxu0 %v2003
        %v2175 = vpop.f32.mrf.mxu0
        %v2176 = vadd.f32 %v1990, %v2175
        %v2177 = vpop.f32.mrf.mxu0
        %v2178 = vadd.f32 %v1990, %v2177
        %2179 = vmatprep.mubr.f32.mxu0 0.0
        %2180 = vmatmul.mubr.f32.gmra.mxu0 %v2006
        %v2181 = vpop.f32.mrf.mxu0
        %v2182 = vadd.f32 %v1994, %v2181
        %v2183 = vpop.f32.mrf.mxu0
        %v2184 = vadd.f32 %v1994, %v2183
        %2185 = vdwg.mxu0
        %v2186 = vmul.f32 %v2075, 100.0
        %v2187 = vmul.f32 %v2077, 100.0
        %v2188 = vmul.f32 %v2164, 100.0
        %v2189 = vmul.f32 %v2166, 100.0
        %v2190 = vmul.f32 %v2081, 100.0
        %v2191 = vmul.f32 %v2083, 100.0
        %v2192 = vmul.f32 %v2170, 100.0
        %v2193 = vmul.f32 %v2172, 100.0
        %v2194 = vmul.f32 %v2087, 100.0
        %v2195 = vmul.f32 %v2089, 100.0
        %v2196 = vmul.f32 %v2176, 100.0
        %v2197 = vmul.f32 %v2178, 100.0
        %v2198 = vmul.f32 %v2093, 100.0
        %v2199 = vmul.f32 %v2095, 100.0
        %v2200 = vmul.f32 %v2182, 100.0
        %v2201 = vmul.f32 %v2184, 100.0
        %v2202 = vmin.f32 %v2186, 20.0
        %v2203 = vmin.f32 %v2187, 20.0
        %v2204 = vmin.f32 %v2188, 20.0
        %v2205 = vmin.f32 %v2189, 20.0
        %v2206 = vmin.f32 %v2190, 20.0
        %v2207 = vmin.f32 %v2191, 20.0
        %v2208 = vmin.f32 %v2192, 20.0
        %v2209 = vmin.f32 %v2193, 20.0
        %v2210 = vmin.f32 %v2194, 20.0
        %v2211 = vmin.f32 %v2195, 20.0
        %v2212 = vmin.f32 %v2196, 20.0
        %v2213 = vmin.f32 %v2197, 20.0
        %v2214 = vmin.f32 %v2198, 20.0
        %v2215 = vmin.f32 %v2199, 20.0
        %v2216 = vmin.f32 %v2200, 20.0
        %v2217 = vmin.f32 %v2201, 20.0
        %v2218 = vmul.f32 %v2202, 1.442695
        %v2219 = vpow.pop %v2218
        %v2220 = vmul.f32 %v2203, 1.442695
        %v2221 = vpow.pop %v2220
        %v2222 = vmul.f32 %v2204, 1.442695
        %v2223 = vpow.pop %v2222
        %v2224 = vmul.f32 %v2205, 1.442695
        %v2225 = vpow.pop %v2224
        %v2226 = vmul.f32 %v2206, 1.442695
        %v2227 = vpow.pop %v2226
        %v2228 = vmul.f32 %v2207, 1.442695
        %v2229 = vpow.pop %v2228
        %v2230 = vmul.f32 %v2208, 1.442695
        %v2231 = vpow.pop %v2230
        %v2232 = vmul.f32 %v2209, 1.442695
        %v2233 = vpow.pop %v2232
        %v2234 = vmul.f32 %v2210, 1.442695
        %v2235 = vpow.pop %v2234
        %v2236 = vmul.f32 %v2211, 1.442695
        %v2237 = vpow.pop %v2236
        %v2238 = vmul.f32 %v2212, 1.442695
        %v2239 = vpow.pop %v2238
        %v2240 = vmul.f32 %v2213, 1.442695
        %v2241 = vpow.pop %v2240
        %v2242 = vmul.f32 %v2214, 1.442695
        %v2243 = vpow.pop %v2242
        %v2244 = vmul.f32 %v2215, 1.442695
        %v2245 = vpow.pop %v2244
        %v2246 = vmul.f32 %v2216, 1.442695
        %v2247 = vpow.pop %v2246
        %v2248 = vmul.f32 %v2217, 1.442695
        %v2249 = vpow.pop %v2248
        %v2250 = vadd.f32 %v2219, 1.0
        %v2251 = vlog2.pop %v2250
        %v2252 = vmul.f32 %v2251, 0.6931472
        %v2253 = vmul.f32 -0.5, %v2219
        %v2254 = vadd.f32 %v2253, 1.0
        %v2255 = vmul.f32 %v2254, %v2219
        %v2256 = vand.u32 2147483647, %v2219
        %vm2257 = vcmp.lt.f32.partialorder %v2256, 0.0004427343
        %v2258 = vsel %vm2257, %v2255, %v2252
        %v2259 = vadd.f32 %v2221, 1.0
        %v2260 = vlog2.pop %v2259
        %v2261 = vmul.f32 %v2260, 0.6931472
        %v2262 = vmul.f32 -0.5, %v2221
        %v2263 = vadd.f32 %v2262, 1.0
        %v2264 = vmul.f32 %v2263, %v2221
        %v2265 = vand.u32 2147483647, %v2221
        %vm2266 = vcmp.lt.f32.partialorder %v2265, 0.0004427343
        %v2267 = vsel %vm2266, %v2264, %v2261
        %v2268 = vadd.f32 %v2223, 1.0
        %v2269 = vlog2.pop %v2268
        %v2270 = vmul.f32 %v2269, 0.6931472
        %v2271 = vmul.f32 -0.5, %v2223
        %v2272 = vadd.f32 %v2271, 1.0
        %v2273 = vmul.f32 %v2272, %v2223
        %v2274 = vand.u32 2147483647, %v2223
        %vm2275 = vcmp.lt.f32.partialorder %v2274, 0.0004427343
        %v2276 = vsel %vm2275, %v2273, %v2270
        %v2277 = vadd.f32 %v2225, 1.0
        %v2278 = vlog2.pop %v2277
        %v2279 = vmul.f32 %v2278, 0.6931472
        %v2280 = vmul.f32 -0.5, %v2225
        %v2281 = vadd.f32 %v2280, 1.0
        %v2282 = vmul.f32 %v2281, %v2225
        %v2283 = vand.u32 2147483647, %v2225
        %vm2284 = vcmp.lt.f32.partialorder %v2283, 0.0004427343
        %v2285 = vsel %vm2284, %v2282, %v2279
        %v2286 = vadd.f32 %v2227, 1.0
        %v2287 = vlog2.pop %v2286
        %v2288 = vmul.f32 %v2287, 0.6931472
        %v2289 = vmul.f32 -0.5, %v2227
        %v2290 = vadd.f32 %v2289, 1.0
        %v2291 = vmul.f32 %v2290, %v2227
        %v2292 = vand.u32 2147483647, %v2227
        %vm2293 = vcmp.lt.f32.partialorder %v2292, 0.0004427343
        %v2294 = vsel %vm2293, %v2291, %v2288
        %v2295 = vadd.f32 %v2229, 1.0
        %v2296 = vlog2.pop %v2295
        %v2297 = vmul.f32 %v2296, 0.6931472
        %v2298 = vmul.f32 -0.5, %v2229
        %v2299 = vadd.f32 %v2298, 1.0
        %v2300 = vmul.f32 %v2299, %v2229
        %v2301 = vand.u32 2147483647, %v2229
        %vm2302 = vcmp.lt.f32.partialorder %v2301, 0.0004427343
        %v2303 = vsel %vm2302, %v2300, %v2297
        %v2304 = vadd.f32 %v2231, 1.0
        %v2305 = vlog2.pop %v2304
        %v2306 = vmul.f32 %v2305, 0.6931472
        %v2307 = vmul.f32 -0.5, %v2231
        %v2308 = vadd.f32 %v2307, 1.0
        %v2309 = vmul.f32 %v2308, %v2231
        %v2310 = vand.u32 2147483647, %v2231
        %vm2311 = vcmp.lt.f32.partialorder %v2310, 0.0004427343
        %v2312 = vsel %vm2311, %v2309, %v2306
        %v2313 = vadd.f32 %v2233, 1.0
        %v2314 = vlog2.pop %v2313
        %v2315 = vmul.f32 %v2314, 0.6931472
        %v2316 = vmul.f32 -0.5, %v2233
        %v2317 = vadd.f32 %v2316, 1.0
        %v2318 = vmul.f32 %v2317, %v2233
        %v2319 = vand.u32 2147483647, %v2233
        %vm2320 = vcmp.lt.f32.partialorder %v2319, 0.0004427343
        %v2321 = vsel %vm2320, %v2318, %v2315
        %v2322 = vadd.f32 %v2235, 1.0
        %v2323 = vlog2.pop %v2322
        %v2324 = vmul.f32 %v2323, 0.6931472
        %v2325 = vmul.f32 -0.5, %v2235
        %v2326 = vadd.f32 %v2325, 1.0
        %v2327 = vmul.f32 %v2326, %v2235
        %v2328 = vand.u32 2147483647, %v2235
        %vm2329 = vcmp.lt.f32.partialorder %v2328, 0.0004427343
        %v2330 = vsel %vm2329, %v2327, %v2324
        %v2331 = vadd.f32 %v2237, 1.0
        %v2332 = vlog2.pop %v2331
        %v2333 = vmul.f32 %v2332, 0.6931472
        %v2334 = vmul.f32 -0.5, %v2237
        %v2335 = vadd.f32 %v2334, 1.0
        %v2336 = vmul.f32 %v2335, %v2237
        %v2337 = vand.u32 2147483647, %v2237
        %vm2338 = vcmp.lt.f32.partialorder %v2337, 0.0004427343
        %v2339 = vsel %vm2338, %v2336, %v2333
        %v2340 = vadd.f32 %v2239, 1.0
        %v2341 = vlog2.pop %v2340
        %v2342 = vmul.f32 %v2341, 0.6931472
        %v2343 = vmul.f32 -0.5, %v2239
        %v2344 = vadd.f32 %v2343, 1.0
        %v2345 = vmul.f32 %v2344, %v2239
        %v2346 = vand.u32 2147483647, %v2239
        %vm2347 = vcmp.lt.f32.partialorder %v2346, 0.0004427343
        %v2348 = vsel %vm2347, %v2345, %v2342
        %v2349 = vadd.f32 %v2241, 1.0
        %v2350 = vlog2.pop %v2349
        %v2351 = vmul.f32 %v2350, 0.6931472
        %v2352 = vmul.f32 -0.5, %v2241
        %v2353 = vadd.f32 %v2352, 1.0
        %v2354 = vmul.f32 %v2353, %v2241
        %v2355 = vand.u32 2147483647, %v2241
        %vm2356 = vcmp.lt.f32.partialorder %v2355, 0.0004427343
        %v2357 = vsel %vm2356, %v2354, %v2351
        %v2358 = vadd.f32 %v2243, 1.0
        %v2359 = vlog2.pop %v2358
        %v2360 = vmul.f32 %v2359, 0.6931472
        %v2361 = vmul.f32 -0.5, %v2243
        %v2362 = vadd.f32 %v2361, 1.0
        %v2363 = vmul.f32 %v2362, %v2243
        %v2364 = vand.u32 2147483647, %v2243
        %vm2365 = vcmp.lt.f32.partialorder %v2364, 0.0004427343
        %v2366 = vsel %vm2365, %v2363, %v2360
        %v2367 = vadd.f32 %v2245, 1.0
        %v2368 = vlog2.pop %v2367
        %v2369 = vmul.f32 %v2368, 0.6931472
        %v2370 = vmul.f32 -0.5, %v2245
        %v2371 = vadd.f32 %v2370, 1.0
        %v2372 = vmul.f32 %v2371, %v2245
        %v2373 = vand.u32 2147483647, %v2245
        %vm2374 = vcmp.lt.f32.partialorder %v2373, 0.0004427343
        %v2375 = vsel %vm2374, %v2372, %v2369
        %v2376 = vadd.f32 %v2247, 1.0
        %v2377 = vlog2.pop %v2376
        %v2378 = vmul.f32 %v2377, 0.6931472
        %v2379 = vmul.f32 -0.5, %v2247
        %v2380 = vadd.f32 %v2379, 1.0
        %v2381 = vmul.f32 %v2380, %v2247
        %v2382 = vand.u32 2147483647, %v2247
        %vm2383 = vcmp.lt.f32.partialorder %v2382, 0.0004427343
        %v2384 = vsel %vm2383, %v2381, %v2378
        %v2385 = vadd.f32 %v2249, 1.0
        %v2386 = vlog2.pop %v2385
        %v2387 = vmul.f32 %v2386, 0.6931472
        %v2388 = vmul.f32 -0.5, %v2249
        %v2389 = vadd.f32 %v2388, 1.0
        %v2390 = vmul.f32 %v2389, %v2249
        %v2391 = vand.u32 2147483647, %v2249
        %vm2392 = vcmp.lt.f32.partialorder %v2391, 0.0004427343
        %v2393 = vsel %vm2392, %v2390, %v2387
        %v2394 = vmul.f32 %v2258, 0.01
        %v2395 = vmul.f32 %v2267, 0.01
        %v2396 = vmul.f32 %v2276, 0.01
        %v2397 = vmul.f32 %v2285, 0.01
        %v2398 = vmul.f32 %v2294, 0.01
        %v2399 = vmul.f32 %v2303, 0.01
        %v2400 = vmul.f32 %v2312, 0.01
        %v2401 = vmul.f32 %v2321, 0.01
        %v2402 = vmul.f32 %v2330, 0.01
        %v2403 = vmul.f32 %v2339, 0.01
        %v2404 = vmul.f32 %v2348, 0.01
        %v2405 = vmul.f32 %v2357, 0.01
        %v2406 = vmul.f32 %v2366, 0.01
        %v2407 = vmul.f32 %v2375, 0.01
        %v2408 = vmul.f32 %v2384, 0.01
        %v2409 = vmul.f32 %v2393, 0.01
        %vm2410 = vcmp.gt.f32.partialorder %v2186, 20.0
        %vm2411 = vcmp.gt.f32.partialorder %v2187, 20.0
        %vm2412 = vcmp.gt.f32.partialorder %v2188, 20.0
        %vm2413 = vcmp.gt.f32.partialorder %v2189, 20.0
        %vm2414 = vcmp.gt.f32.partialorder %v2190, 20.0
        %vm2415 = vcmp.gt.f32.partialorder %v2191, 20.0
        %vm2416 = vcmp.gt.f32.partialorder %v2192, 20.0
        %vm2417 = vcmp.gt.f32.partialorder %v2193, 20.0
        %vm2418 = vcmp.gt.f32.partialorder %v2194, 20.0
        %vm2419 = vcmp.gt.f32.partialorder %v2195, 20.0
        %vm2420 = vcmp.gt.f32.partialorder %v2196, 20.0
        %vm2421 = vcmp.gt.f32.partialorder %v2197, 20.0
        %vm2422 = vcmp.gt.f32.partialorder %v2198, 20.0
        %vm2423 = vcmp.gt.f32.partialorder %v2199, 20.0
        %vm2424 = vcmp.gt.f32.partialorder %v2200, 20.0
        %vm2425 = vcmp.gt.f32.partialorder %v2201, 20.0
        %v2426 = vsel %vm2410, %v2075, %v2394
        %v2427 = vsel %vm2411, %v2077, %v2395
        %v2428 = vsel %vm2412, %v2164, %v2396
        %v2429 = vsel %vm2413, %v2166, %v2397
        %v2430 = vsel %vm2414, %v2081, %v2398
        %v2431 = vsel %vm2415, %v2083, %v2399
        %v2432 = vsel %vm2416, %v2170, %v2400
        %v2433 = vsel %vm2417, %v2172, %v2401
        %v2434 = vsel %vm2418, %v2087, %v2402
        %v2435 = vsel %vm2419, %v2089, %v2403
        %v2436 = vsel %vm2420, %v2176, %v2404
        %v2437 = vsel %vm2421, %v2178, %v2405
        %v2438 = vsel %vm2422, %v2093, %v2406
        %v2439 = vsel %vm2423, %v2095, %v2407
        %v2440 = vsel %vm2424, %v2182, %v2408
        %v2441 = vsel %vm2425, %v2184, %v2409
        %v2442 = vld [vmem:[%s5] sm:$0x1]
        %2443 = vset.pattern.permute.xlu0 4
        %2444 = vperm.xlu0 %2443, %v324
        %v2445 = vpop.permute.xlu0 %2444
        %v2448 = vsel %vm823, %v2442, 0
        %2450 = vmatprep.subr.mxu0 0.0
        %2451 = vmatpush1.msra.mxu0 0.0
        %2452 = vmatprep.subr.mxu0 0.0
        %2453 = vmatpush1.msra.mxu0 0.0
        %2454 = vmatprep.subr.mxu0 0.0
        %2455 = vmatpush1.msra.mxu0 0.0
        %2456 = vmatprep.subr.mxu0 0.0
        %2457 = vmatpush1.msra.mxu0 0.0
        %2458 = vmatprep.subr.mxu0 0.0
        %2459 = vmatpush1.msra.mxu0 0.0
        %2460 = vmatprep.subr.mxu0 0.0
        %2461 = vmatpush1.msra.mxu0 0.0
        %2462 = vmatprep.subr.mxu0 0.0
        %2463 = vmatpush1.msra.mxu0 0.0
        %2464 = vmatprep.subr.mxu0 0.0
        %2465 = vmatpush1.msra.mxu0 0.0
        %2466 = vmatprep.subr.mxu0 0.0
        %2467 = vmatpush1.msra.mxu0 0.0
        %2468 = vmatprep.subr.mxu0 0.0
        %2469 = vmatpush1.msra.mxu0 0.0
        %2470 = vmatprep.subr.mxu0 0.0
        %2471 = vmatpush1.msra.mxu0 0.0
        %2472 = vmatprep.subr.mxu0 0.0
        %2473 = vmatpush1.msra.mxu0 0.0
        %2474 = vmatprep.subr.mxu0 %v2439
        %2475 = vmatpush1.msra.mxu0 %v2438
        %2476 = vmatprep.subr.mxu0 %v2435
        %2477 = vmatpush1.msra.mxu0 %v2434
        %2478 = vmatprep.subr.mxu0 %v2431
        %2479 = vmatpush1.msra.mxu0 %v2430
        %2480 = vmatprep.subr.mxu0 %v2427
        %2481 = vmatpush1.msra.mxu0 %v2426
        %2482 = vmatprep.subr.mxu0 0.0
        %2483 = vmatpush2.msra.mxu0 0.0
        %2484 = vmatprep.subr.mxu0 0.0
        %2485 = vmatpush2.msra.mxu0 0.0
        %2486 = vmatprep.subr.mxu0 0.0
        %2487 = vmatpush2.msra.mxu0 0.0
        %2488 = vmatprep.subr.mxu0 0.0
        %2489 = vmatpush2.msra.mxu0 0.0
        %2490 = vmatprep.subr.mxu0 0.0
        %2491 = vmatpush2.msra.mxu0 0.0
        %2492 = vmatprep.subr.mxu0 0.0
        %2493 = vmatpush2.msra.mxu0 0.0
        %2494 = vmatprep.subr.mxu0 0.0
        %2495 = vmatpush2.msra.mxu0 0.0
        %2496 = vmatprep.subr.mxu0 0.0
        %2497 = vmatpush2.msra.mxu0 0.0
        %2498 = vmatprep.subr.mxu0 0.0
        %2499 = vmatpush2.msra.mxu0 0.0
        %2500 = vmatprep.subr.mxu0 0.0
        %2501 = vmatpush2.msra.mxu0 0.0
        %2502 = vmatprep.subr.mxu0 0.0
        %2503 = vmatpush2.msra.mxu0 0.0
        %2504 = vmatprep.subr.mxu0 0.0
        %2505 = vmatpush2.msra.mxu0 0.0
        %2506 = vmatprep.subr.mxu0 0.0
        %2507 = vmatpush2.msra.mxu0 0.0
        %2508 = vmatprep.subr.mxu0 0.0
        %2509 = vmatpush2.msra.mxu0 0.0
        %2510 = vmatprep.subr.mxu0 0.0
        %2511 = vmatpush2.msra.mxu0 0.0
        %2512 = vmatprep.subr.mxu0 0.0
        %2513 = vmatpush2.msra.mxu0 0.0
        %2514 = vmatprep.mubr.f32.mxu0 0.0
        %2515 = vmatmul.mubr.f32.gmra.mxu0 %v2448
        %v2516 = vpop.f32.mrf.mxu0
        %v2517 = vadd.f32 %v2445, %v2516
        %v2518 = vpop.f32.mrf.mxu0
        %v2519 = vadd.f32 %v2445, %v2518
        %2520 = vdwg.mxu0
        %2521 = vmatprep.subr.mxu0 0.0
        %2522 = vmatpush1.msra.mxu0 0.0
        %2523 = vmatprep.subr.mxu0 0.0
        %2524 = vmatpush1.msra.mxu0 0.0
        %2525 = vmatprep.subr.mxu0 0.0
        %2526 = vmatpush1.msra.mxu0 0.0
        %2527 = vmatprep.subr.mxu0 0.0
        %2528 = vmatpush1.msra.mxu0 0.0
        %2529 = vmatprep.subr.mxu0 0.0
        %2530 = vmatpush1.msra.mxu0 0.0
        %2531 = vmatprep.subr.mxu0 0.0
        %2532 = vmatpush1.msra.mxu0 0.0
        %2533 = vmatprep.subr.mxu0 0.0
        %2534 = vmatpush1.msra.mxu0 0.0
        %2535 = vmatprep.subr.mxu0 0.0
        %2536 = vmatpush1.msra.mxu0 0.0
        %2537 = vmatprep.subr.mxu0 0.0
        %2538 = vmatpush1.msra.mxu0 0.0
        %2539 = vmatprep.subr.mxu0 0.0
        %2540 = vmatpush1.msra.mxu0 0.0
        %2541 = vmatprep.subr.mxu0 0.0
        %2542 = vmatpush1.msra.mxu0 0.0
        %2543 = vmatprep.subr.mxu0 0.0
        %2544 = vmatpush1.msra.mxu0 0.0
        %2545 = vmatprep.subr.mxu0 %v2441
        %2546 = vmatpush1.msra.mxu0 %v2440
        %2547 = vmatprep.subr.mxu0 %v2437
        %2548 = vmatpush1.msra.mxu0 %v2436
        %2549 = vmatprep.subr.mxu0 %v2433
        %2550 = vmatpush1.msra.mxu0 %v2432
        %2551 = vmatprep.subr.mxu0 %v2429
        %2552 = vmatpush1.msra.mxu0 %v2428
        %2553 = vmatprep.subr.mxu0 0.0
        %2554 = vmatpush2.msra.mxu0 0.0
        %2555 = vmatprep.subr.mxu0 0.0
        %2556 = vmatpush2.msra.mxu0 0.0
        %2557 = vmatprep.subr.mxu0 0.0
        %2558 = vmatpush2.msra.mxu0 0.0
        %2559 = vmatprep.subr.mxu0 0.0
        %2560 = vmatpush2.msra.mxu0 0.0
        %2561 = vmatprep.subr.mxu0 0.0
        %2562 = vmatpush2.msra.mxu0 0.0
        %2563 = vmatprep.subr.mxu0 0.0
        %2564 = vmatpush2.msra.mxu0 0.0
        %2565 = vmatprep.subr.mxu0 0.0
        %2566 = vmatpush2.msra.mxu0 0.0
        %2567 = vmatprep.subr.mxu0 0.0
        %2568 = vmatpush2.msra.mxu0 0.0
        %2569 = vmatprep.subr.mxu0 0.0
        %2570 = vmatpush2.msra.mxu0 0.0
        %2571 = vmatprep.subr.mxu0 0.0
        %2572 = vmatpush2.msra.mxu0 0.0
        %2573 = vmatprep.subr.mxu0 0.0
        %2574 = vmatpush2.msra.mxu0 0.0
        %2575 = vmatprep.subr.mxu0 0.0
        %2576 = vmatpush2.msra.mxu0 0.0
        %2577 = vmatprep.subr.mxu0 0.0
        %2578 = vmatpush2.msra.mxu0 0.0
        %2579 = vmatprep.subr.mxu0 0.0
        %2580 = vmatpush2.msra.mxu0 0.0
        %2581 = vmatprep.subr.mxu0 0.0
        %2582 = vmatpush2.msra.mxu0 0.0
        %2583 = vmatprep.subr.mxu0 0.0
        %2584 = vmatpush2.msra.mxu0 0.0
        %2585 = vmatprep.mubr.f32.mxu0 0.0
        %2586 = vmatmul.mubr.f32.gmra.mxu0 %v2448
        %v2587 = vpop.f32.mrf.mxu0
        %v2588 = vadd.f32 %v2445, %v2587
        %v2589 = vpop.f32.mrf.mxu0
        %v2590 = vadd.f32 %v2445, %v2589
        %2591 = vdwg.mxu0
        %v2596 = vcombine.low %v2517, %v2519
        %v2597 = vcombine.low %v2588, %v2590
        %v2599 = vunpack.c.l.s4 1966171168
        %v2600 = vunpack.c.0.s8 %v2599
        %v2601 = vlaneseq
        %v2602 = vshrl.u32 %v2601, 7
        %v2603 = vsub.s32 %v2600, %v2602
        %v2604 = vrot.slane %v2596, %v2603
        %v2606 = vunpack.c.l.s4 1966171168
        %v2607 = vunpack.c.0.s8 %v2606
        %v2608 = vlaneseq
        %v2609 = vshrl.u32 %v2608, 7
        %v2610 = vsub.s32 %v2607, %v2609
        %v2611 = vrot.slane %v2597, %v2610
        %v2612 = vcombine.low %v2604, %v2611
        %v2614 = vunpack.c.l.s4 1966171168
        %v2615 = vunpack.c.0.s8 %v2614
        %v2616 = vlaneseq
        %v2617 = vshrl.u32 %v2616, 7
        %v2618 = vsub.s32 %v2615, %v2617
        %v2619 = vrot.slane %v2612, %v2618
        %v2621 = vlaneseq
        %vm2622 = vcmp.ge.s32.totalorder %v2621, 0
        %vm2623 = vcmp.lt.s32.totalorder %v2621, 512
        %vm2624 = vmand %vm2622, %vm2623
        %2625 = vst.msk [vmem:[%s316] sm:$0xf] %vm2624, %v2619
        %s2626 = sand.u32 %s183, 1
        %s2627 = scalar_lea.sflag [#allocation4], %s2626
        %s2628 = sand.u32 %s183, 1
        %s2629 = smul.addr %s2628, 4
        %s2630 = scalar_lea.vmem [#allocation8], %s2629
        // Predicated region
        $region61: #{tpu_custom_call.1} parent=47 // pred_check
          %p2631 = pneg %p193
        $region62: #{tpu_custom_call.1} parent=47 // pred_check_branch
          %2633 = sbr.rel (%p2631) target = $region64
        $region63: #{tpu_custom_call.1} parent=47 // pred_region
          %s2634 = smul.u32 4, %s23
          %s2636 = ssub.s32 64, 64
          %2637 = vsyncadd %s2627, %s2636
          %s2638 = smul.addr %s2634, 16
          %s2639 = scalar_lea.hbm %s7, %s2638
          %s2641 = sshll.u32 %s2630, 4
          %s2642 = int_to_ptr.vmem [resolvable:$true] %s2641
          %2644 = dma.vmem_to_hbm [thread:$0]  %s2642, 64, %s2639, %s2627
        $region64: #{tpu_custom_call.1} parent=47 // pred_fallthru
          _
      $region48: #{tpu_custom_call.1} parent=5 // pred_fallthru
        _
      %p2645 = scmp.le.s32.totalorder 2, %s18
      // Predicated region
      $region65: #{tpu_custom_call.1} parent=5 // pred_check
        %p2646 = pneg %p2645
      $region66: #{tpu_custom_call.1} parent=5 // pred_check_branch
        %2648 = sbr.rel (%p2646) target = $region68
      $region67: #{tpu_custom_call.1} parent=5 // pred_region
        %s2649 = ssub.s32 %s18, 2
        // Predicated region
        $region69: #{tpu_custom_call.1} parent=67 // pred_check
          %p2650 = pneg %p199
        $region70: #{tpu_custom_call.1} parent=67 // pred_check_branch
          %2652 = sbr.rel (%p2650) target = $region72
        $region71: #{tpu_custom_call.1} parent=67 // pred_region
          %s2653 = sand.u32 %s184, 1
          %s2654 = scalar_lea.sflag [#allocation4], %s2653
          %s2655 = sand.u32 %s184, 1
          %s2656 = smul.addr %s2655, 4
          %s2657 = scalar_lea.vmem [#allocation8], %s2656
          %2658 = dma.done %s2654, 64
        $region72: #{tpu_custom_call.1} parent=67 // pred_fallthru
          _
      $region68: #{tpu_custom_call.1} parent=5 // pred_fallthru
        _
    $region6: #{tpu_custom_call.1} parent=1 // loop_footer
      %s22 = sadd.s32 1, %s18
    $region7: #{tpu_custom_call.1} parent=1 // loop_footer_branch
      %17 = sbr.rel target = $region3
    $region8: #{tpu_custom_call.1} parent=1 // loop_exit
      _
    %2659 = vsyncpa [#allocation3], 1
    %s2660 = scalar_lea.sflag [#allocation3], 1
    %2661 = vsyncpa %s2660, 1
    %2662 = vsyncpa [#allocation6], 1
    %2663 = vsyncpa [#allocation4], 1
    %s2664 = scalar_lea.sflag [#allocation4], 1
    %2665 = vsyncpa %s2664, 1

</llo_original>
